<compile_context>
chip_gen: v6e
topology: v6e:2x2x1
jax: 0.10.0
libtpu: 0.0.40
codegen_flags: <defaults>
</compile_context>

<pallas_src>
import jax
import jax.numpy as jnp
from jax.experimental import pallas as pl
from jax.experimental.pallas import tpu as pltpu


def _mlp_kernel(x_ref, w1_ref, b1_ref, w2_ref, b2_ref, o_ref):
    # In-kernel cast of the activation tile to the weight compute dtype (bf16):
    # VPU work hidden under the MXU/DMA; avoids a separate wrapper-side HBM pass.
    x = x_ref[...].astype(w1_ref.dtype)
    # fc1: [TB, D_in] @ [D_in, H] on the MXU, f32 accumulation.
    h = jnp.dot(x, w1_ref[...], preferred_element_type=jnp.float32)
    h = jnp.maximum(h + b1_ref[...], 0.0)            # bias + ReLU in f32 (VPU)
    # dropout(p=0.2): eval-mode identity.
    # TODO(synk): training-mode dropout needs pltpu.prng_seed/prng_random_bits + mask/scale.
    # fc2: [TB, H] @ [H, D_out], bf16 operands, f32 accumulation; final cast to
    # the output dtype happens here so no post-kernel HBM pass is needed.
    out = jnp.dot(h.astype(w2_ref.dtype), w2_ref[...],
                  preferred_element_type=jnp.float32)
    o_ref[...] = (out + b2_ref[...]).astype(o_ref.dtype)


def _round_up(n, m):
    return ((n + m - 1) // m) * m


def _vmem_limit_bytes():
    # Per-chip scoped-VMEM ceiling: ~3/4 of physical VMEM (96 MiB on v5e/v6e's
    # 128 MiB, 48 MiB on v7x's 64 MiB) instead of a hard-coded v7x-safe value.
    try:
        cap = pltpu.get_tpu_info().vmem_capacity_bytes
    except Exception:
        cap = 64 * 1024 * 1024  # conservative fallback (v7x-sized)
    return int(min(cap * 3 // 4, 112 * 1024 * 1024))


def _pick_batch_tile(B, D_in, H, D_out, x_item, w_item, o_item,
                     tb_max, vmem_limit, weight_buffers):
    """Largest MXU-friendly batch tile that fits the VMEM budget."""
    # Fixed footprint: weights + biases (x buffer count).
    fixed = weight_buffers * ((D_in * H + H * D_out) * w_item + (H + D_out) * 4)
    # Per-batch-row footprint: double-buffered x tile + out tile, plus the f32
    # intermediate h and its bf16 copy used as the fc2 MXU operand.
    per_row = 2 * D_in * x_item + 2 * D_out * o_item + H * (4 + w_item)
    avail = int(vmem_limit * 0.9) - fixed            # 10% headroom for Mosaic scratch
    tb_fit = max(16, avail // per_row) if avail > per_row * 16 else 16

    if B >= 256:
        # Keep >= 2 tiles so dimension_semantics=("parallel",) can feed both
        # TensorCores on v7x; harmless on single-TC v5e/v6e (bandwidth-bound).
        tb = min(tb_max, _round_up(pl.cdiv(B, 2), 128))
    else:
        tb = min(tb_max, _round_up(B, 16))
    tb = min(tb, tb_fit)
    # Alignment: multiples of 128 (full MXU rows) when possible, otherwise 16
    # (bf16 (16,128) sublane packing).
    if tb >= 128:
        tb = (tb // 128) * 128
    else:
        tb = max(16, (tb // 16) * 16)
    return int(tb)


def embedding_projector(x, w1, b1, w2, b2, *, tb=512, out_dtype=None):
    """x: [B, D_in]; w1: [D_in, H]; b1: [1, H]; w2: [H, D_out]; b2: [1, D_out].

    Weights are consumed in their storage dtype (ideally bf16, cast once at
    init); x stays at its native dtype and is cast to the weight dtype inside
    the kernel. No wrapper-side pad / cast / slice passes.
    """
    B, D_in = x.shape
    H = w1.shape[1]
    D_out = w2.shape[1]
    out_dtype = x.dtype if out_dtype is None else out_dtype

    # Biases are tiny: keep them as f32 [1, N] for the f32 epilogue.
    b1 = jnp.asarray(b1, jnp.float32).reshape(1, H)
    b2 = jnp.asarray(b2, jnp.float32).reshape(1, D_out)

    x_item = jnp.dtype(x.dtype).itemsize
    w_item = jnp.dtype(w1.dtype).itemsize
    o_item = jnp.dtype(out_dtype).itemsize
    vmem_limit = _vmem_limit_bytes()

    # Single-pass traffic / flops for XLA's scheduler.
    flops = 2 * B * (D_in * H + H * D_out)
    bytes_accessed = int(B * D_in * x_item                     # x in (native dtype)
                         + (D_in * H + H * D_out) * w_item     # w1, w2 (resident)
                         + (H + D_out) * 4                     # b1, b2 (f32)
                         + B * D_out * o_item)                 # out (final dtype)

    def _invoke(weight_buffers):
        tile = _pick_batch_tile(B, D_in, H, D_out, x_item, w_item, o_item,
                                tb, vmem_limit, weight_buffers)
        grid = (pl.cdiv(B, tile),)   # ragged last tile masked by Pallas: no jnp.pad
        w_kwargs = ({"pipeline_mode": pl.Buffered(1)}
                    if weight_buffers == 1 else {})
        return pl.pallas_call(
            _mlp_kernel,
            out_shape=jax.ShapeDtypeStruct((B, D_out), out_dtype),
            grid=grid,
            in_specs=[
                pl.BlockSpec((tile, D_in), lambda i: (i, 0)),            # x tile, double-buffered
                pl.BlockSpec((D_in, H), lambda i: (0, 0), **w_kwargs),   # w1 VMEM-resident
                pl.BlockSpec((1, H), lambda i: (0, 0), **w_kwargs),      # b1 resident
                pl.BlockSpec((H, D_out), lambda i: (0, 0), **w_kwargs),  # w2 VMEM-resident
                pl.BlockSpec((1, D_out), lambda i: (0, 0), **w_kwargs),  # b2 resident
            ],
            out_specs=pl.BlockSpec((tile, D_out), lambda i: (i, 0)),
            compiler_params=pltpu.CompilerParams(
                dimension_semantics=("parallel",),   # shard batch tiles across TCs (v7x)
                vmem_limit_bytes=vmem_limit,
            ),
            cost_estimate=pl.CostEstimate(
                flops=flops, bytes_accessed=bytes_accessed, transcendentals=0),
        )(x, w1, b1, w2, b2)

    try:
        # Weights/biases have a constant index_map -> request single buffering so
        # they don't occupy 2x VMEM (matters at realistic sizes on v7x's 64 MiB).
        return _invoke(weight_buffers=1)
    except Exception:
        # pl.Buffered(1) unsupported by this Pallas/Mosaic build: fall back to
        # default double-buffering (already accounted for in the VMEM budget).
        return _invoke(weight_buffers=2)


def init_params(key, input_dim, hidden_dim, output_dim, dtype=jnp.float32):
    """nn.Linear-style init: U(-1/sqrt(fan_in), 1/sqrt(fan_in)); weights as [in, out]."""
    k1, k2, k3, k4 = jax.random.split(key, 4)
    bound1 = 1.0 / (input_dim ** 0.5)
    bound2 = 1.0 / (hidden_dim ** 0.5)
    w1 = jax.random.uniform(k1, (input_dim, hidden_dim), dtype, -bound1, bound1)
    b1 = jax.random.uniform(k2, (1, hidden_dim), dtype, -bound1, bound1)
    w2 = jax.random.uniform(k3, (hidden_dim, output_dim), dtype, -bound2, bound2)
    b2 = jax.random.uniform(k4, (1, output_dim), dtype, -bound2, bound2)
    return w1, b1, w2, b2


if __name__ == "__main__":
    # Scaled-down module shapes; batch chosen so the grid has 2 tiles (feeds both
    # v7x TensorCores) and the last tile is ragged (exercises the no-pad path).
    B, D_IN, H, D_OUT = 200, 32, 128, 256

    key = jax.random.PRNGKey(0)
    kx, kp = jax.random.split(key)
    x = jax.random.normal(kx, (B, D_IN), dtype=jnp.float32)
    w1f, b1, w2f, b2 = init_params(kp, D_IN, H, D_OUT)

    # Cast weights ONCE at init to bf16 (persistent storage dtype -> half the
    # weight HBM traffic, 2x MXU throughput on v6e/v7x); biases stay f32.
    w1 = w1f.astype(jnp.bfloat16)
    w2 = w2f.astype(jnp.bfloat16)

    out = embedding_projector(x, w1, b1, w2, b2)
    out = jax.block_until_ready(out)
    assert out.shape == (B, D_OUT)
    assert out.dtype == x.dtype

    # Reference 1: plain-JAX forward with the SAME bf16 operands / f32 accumulation
    # (should match the kernel almost exactly).
    h_ref = jnp.maximum(
        jnp.dot(x.astype(jnp.bfloat16), w1, preferred_element_type=jnp.float32) + b1, 0.0)
    ref_bf16 = jnp.dot(h_ref.astype(jnp.bfloat16), w2,
                       preferred_element_type=jnp.float32) + b2
    assert jnp.allclose(out, ref_bf16, atol=2e-3, rtol=2e-3)

    # Reference 2: full-f32 forward (loose tolerance; bf16 operands lose ~8 mantissa bits).
    ref_f32 = jnp.maximum(x @ w1f + b1, 0.0) @ w2f + b2
    assert jnp.allclose(out, ref_f32, atol=5e-2, rtol=5e-2)

    print("KERNEL_OK")
</pallas_src>

<mosaic_0001>
module attributes {stable_mosaic.version = 11 : i64} {
  func.func @_mlp_kernel(%arg0: i32, %arg1: memref<128x32xf32, #tpu.memory_space<vmem>>, %arg2: memref<32x128xbf16, #tpu.memory_space<vmem>>, %arg3: memref<1x128xf32, #tpu.memory_space<vmem>>, %arg4: memref<128x256xbf16, #tpu.memory_space<vmem>>, %arg5: memref<1x256xf32, #tpu.memory_space<vmem>>, %arg6: memref<128x256xf32, #tpu.memory_space<vmem>>) attributes {dimension_semantics = [#tpu.dimension_semantics<parallel>], iteration_bounds = array<i64: 2>, scalar_prefetch = 0 : i64, scratch_operands = 0 : i64, tpu.core_type = #tpu.core_type<tc>, window_params = [{transform_indices = @transform_0, window_bounds = array<i64: 128, 32>}, {pipeline_mode = #tpu.pipeline_mode<synchronous>, transform_indices = @transform_1, window_bounds = array<i64: 32, 128>}, {pipeline_mode = #tpu.pipeline_mode<synchronous>, transform_indices = @transform_2, window_bounds = array<i64: 1, 128>}, {pipeline_mode = #tpu.pipeline_mode<synchronous>, transform_indices = @transform_3, window_bounds = array<i64: 128, 256>}, {pipeline_mode = #tpu.pipeline_mode<synchronous>, transform_indices = @transform_4, window_bounds = array<i64: 1, 256>}, {transform_indices = @transform_5, window_bounds = array<i64: 128, 256>}]} {
    %c0 = arith.constant 0 : index
    %c0_0 = arith.constant 0 : index
    %0 = vector.load %arg1[%c0, %c0_0] : memref<128x32xf32, #tpu.memory_space<vmem>>, vector<128x32xf32>
    %1 = arith.truncf %0 : vector<128x32xf32> to vector<128x32xbf16>
    %c0_1 = arith.constant 0 : index
    %c0_2 = arith.constant 0 : index
    %2 = vector.load %arg2[%c0_1, %c0_2] : memref<32x128xbf16, #tpu.memory_space<vmem>>, vector<32x128xbf16>
    %cst = arith.constant dense<0.000000e+00> : vector<128x128xf32>
    %3 = tpu.matmul %1, %2, %cst {dimension_numbers = #tpu.dot_dimension_numbers<[1], [0], [0], [1], [0, 0, 1, 1], [], []>} : vector<128x32xbf16>, vector<32x128xbf16>, vector<128x128xf32> -> vector<128x128xf32>
    %c0_3 = arith.constant 0 : index
    %c0_4 = arith.constant 0 : index
    %4 = vector.load %arg3[%c0_3, %c0_4] : memref<1x128xf32, #tpu.memory_space<vmem>>, vector<1x128xf32>
    %5 = vector.broadcast %4 : vector<1x128xf32> to vector<128x128xf32>
    %6 = arith.addf %3, %5 : vector<128x128xf32>
    %cst_5 = arith.constant 0.000000e+00 : f32
    %7 = vector.broadcast %cst_5 : f32 to vector<128x128xf32>
    %8 = arith.maximumf %6, %7 : vector<128x128xf32>
    %9 = arith.truncf %8 : vector<128x128xf32> to vector<128x128xbf16>
    %c0_6 = arith.constant 0 : index
    %c0_7 = arith.constant 0 : index
    %10 = vector.load %arg4[%c0_6, %c0_7] : memref<128x256xbf16, #tpu.memory_space<vmem>>, vector<128x256xbf16>
    %cst_8 = arith.constant dense<0.000000e+00> : vector<128x256xf32>
    %11 = tpu.matmul %9, %10, %cst_8 {dimension_numbers = #tpu.dot_dimension_numbers<[1], [0], [0], [1], [0, 0, 1, 1], [], []>} : vector<128x128xbf16>, vector<128x256xbf16>, vector<128x256xf32> -> vector<128x256xf32>
    %c0_9 = arith.constant 0 : index
    %c0_10 = arith.constant 0 : index
    %12 = vector.load %arg5[%c0_9, %c0_10] : memref<1x256xf32, #tpu.memory_space<vmem>>, vector<1x256xf32>
    %13 = vector.broadcast %12 : vector<1x256xf32> to vector<128x256xf32>
    %14 = arith.addf %11, %13 : vector<128x256xf32>
    %c0_11 = arith.constant 0 : index
    %c0_12 = arith.constant 0 : index
    %15 = vector.load %arg6[%c0_11, %c0_12] : memref<128x256xf32, #tpu.memory_space<vmem>>, vector<128x256xf32>
    tpu.vector_store %arg6[%c0_11, %c0_12], %14 {strides = array<i32>} : memref<128x256xf32, #tpu.memory_space<vmem>>, vector<128x256xf32>,
    return
  }
  func.func @transform_0(%arg0: i32) -> (i32, i32) {
    %c0_i32 = arith.constant 0 : i32
    %c0_i32_0 = arith.constant 0 : i32
    return %arg0, %c0_i32 : i32, i32
  }
  func.func @transform_1(%arg0: i32) -> (i32, i32) {
    %c0_i32 = arith.constant 0 : i32
    %c0_i32_0 = arith.constant 0 : i32
    %c0_i32_1 = arith.constant 0 : i32
    return %c0_i32, %c0_i32_0 : i32, i32
  }
  func.func @transform_2(%arg0: i32) -> (i32, i32) {
    %c0_i32 = arith.constant 0 : i32
    %c0_i32_0 = arith.constant 0 : i32
    %c0_i32_1 = arith.constant 0 : i32
    return %c0_i32, %c0_i32_0 : i32, i32
  }
  func.func @transform_3(%arg0: i32) -> (i32, i32) {
    %c0_i32 = arith.constant 0 : i32
    %c0_i32_0 = arith.constant 0 : i32
    %c0_i32_1 = arith.constant 0 : i32
    return %c0_i32, %c0_i32_0 : i32, i32
  }
  func.func @transform_4(%arg0: i32) -> (i32, i32) {
    %c0_i32 = arith.constant 0 : i32
    %c0_i32_0 = arith.constant 0 : i32
    %c0_i32_1 = arith.constant 0 : i32
    return %c0_i32, %c0_i32_0 : i32, i32
  }
  func.func @transform_5(%arg0: i32) -> (i32, i32) {
    %c0_i32 = arith.constant 0 : i32
    %c0_i32_0 = arith.constant 0 : i32
    return %arg0, %c0_i32 : i32, i32
  }
}

module attributes {stable_mosaic.version = 11 : i64} {
  func.func @_mlp_kernel(%arg0: i32, %arg1: memref<128x32xf32, #tpu.memory_space<vmem>>, %arg2: memref<32x128xbf16, #tpu.memory_space<vmem>>, %arg3: memref<1x128xf32, #tpu.memory_space<vmem>>, %arg4: memref<128x256xbf16, #tpu.memory_space<vmem>>, %arg5: memref<1x256xf32, #tpu.memory_space<vmem>>, %arg6: memref<128x256xf32, #tpu.memory_space<vmem>>) attributes {dimension_semantics = [#tpu.dimension_semantics<parallel>], iteration_bounds = array<i64: 2>, scalar_prefetch = 0 : i64, scratch_operands = 0 : i64, tpu.core_type = #tpu.core_type<tc>, window_params = [{transform_indices = @transform_0, window_bounds = array<i64: 128, 32>}, {pipeline_mode = #tpu.pipeline_mode<synchronous>, transform_indices = @transform_1, window_bounds = array<i64: 32, 128>}, {pipeline_mode = #tpu.pipeline_mode<synchronous>, transform_indices = @transform_2, window_bounds = array<i64: 1, 128>}, {pipeline_mode = #tpu.pipeline_mode<synchronous>, transform_indices = @transform_3, window_bounds = array<i64: 128, 256>}, {pipeline_mode = #tpu.pipeline_mode<synchronous>, transform_indices = @transform_4, window_bounds = array<i64: 1, 256>}, {transform_indices = @transform_5, window_bounds = array<i64: 128, 256>}]} {
    %c0 = arith.constant 0 : index
    %c0_0 = arith.constant 0 : index
    %0 = vector.load %arg1[%c0, %c0_0] : memref<128x32xf32, #tpu.memory_space<vmem>>, vector<128x32xf32>
    %1 = arith.truncf %0 : vector<128x32xf32> to vector<128x32xbf16>
    %c0_1 = arith.constant 0 : index
    %c0_2 = arith.constant 0 : index
    %2 = vector.load %arg2[%c0_1, %c0_2] : memref<32x128xbf16, #tpu.memory_space<vmem>>, vector<32x128xbf16>
    %cst = arith.constant dense<0.000000e+00> : vector<128x128xf32>
    %3 = tpu.matmul %1, %2, %cst {dimension_numbers = #tpu.dot_dimension_numbers<[1], [0], [0], [1], [0, 0, 1, 1], [], []>} : vector<128x32xbf16>, vector<32x128xbf16>, vector<128x128xf32> -> vector<128x128xf32>
    %c0_3 = arith.constant 0 : index
    %c0_4 = arith.constant 0 : index
    %4 = vector.load %arg3[%c0_3, %c0_4] : memref<1x128xf32, #tpu.memory_space<vmem>>, vector<1x128xf32>
    %5 = vector.broadcast %4 : vector<1x128xf32> to vector<128x128xf32>
    %6 = arith.addf %3, %5 : vector<128x128xf32>
    %cst_5 = arith.constant 0.000000e+00 : f32
    %7 = vector.broadcast %cst_5 : f32 to vector<128x128xf32>
    %8 = arith.maximumf %6, %7 : vector<128x128xf32>
    %9 = arith.truncf %8 : vector<128x128xf32> to vector<128x128xbf16>
    %c0_6 = arith.constant 0 : index
    %c0_7 = arith.constant 0 : index
    %10 = vector.load %arg4[%c0_6, %c0_7] : memref<128x256xbf16, #tpu.memory_space<vmem>>, vector<128x256xbf16>
    %cst_8 = arith.constant dense<0.000000e+00> : vector<128x256xf32>
    %11 = tpu.matmul %9, %10, %cst_8 {dimension_numbers = #tpu.dot_dimension_numbers<[1], [0], [0], [1], [0, 0, 1, 1], [], []>} : vector<128x128xbf16>, vector<128x256xbf16>, vector<128x256xf32> -> vector<128x256xf32>
    %c0_9 = arith.constant 0 : index
    %c0_10 = arith.constant 0 : index
    %12 = vector.load %arg5[%c0_9, %c0_10] : memref<1x256xf32, #tpu.memory_space<vmem>>, vector<1x256xf32>
    %13 = vector.broadcast %12 : vector<1x256xf32> to vector<128x256xf32>
    %14 = arith.addf %11, %13 : vector<128x256xf32>
    %c0_11 = arith.constant 0 : index
    %c0_12 = arith.constant 0 : index
    %15 = vector.load %arg6[%c0_11, %c0_12] : memref<128x256xf32, #tpu.memory_space<vmem>>, vector<128x256xf32>
    tpu.vector_store %arg6[%c0_11, %c0_12], %14 {strides = array<i32>} : memref<128x256xf32, #tpu.memory_space<vmem>>, vector<128x256xf32>,
    return
  }
  func.func @transform_0(%arg0: i32) -> (i32, i32) {
    %c0_i32 = arith.constant 0 : i32
    %c0_i32_0 = arith.constant 0 : i32
    return %arg0, %c0_i32 : i32, i32
  }
  func.func @transform_1(%arg0: i32) -> (i32, i32) {
    %c0_i32 = arith.constant 0 : i32
    %c0_i32_0 = arith.constant 0 : i32
    %c0_i32_1 = arith.constant 0 : i32
    return %c0_i32, %c0_i32_0 : i32, i32
  }
  func.func @transform_2(%arg0: i32) -> (i32, i32) {
    %c0_i32 = arith.constant 0 : i32
    %c0_i32_0 = arith.constant 0 : i32
    %c0_i32_1 = arith.constant 0 : i32
    return %c0_i32, %c0_i32_0 : i32, i32
  }
  func.func @transform_3(%arg0: i32) -> (i32, i32) {
    %c0_i32 = arith.constant 0 : i32
    %c0_i32_0 = arith.constant 0 : i32
    %c0_i32_1 = arith.constant 0 : i32
    return %c0_i32, %c0_i32_0 : i32, i32
  }
  func.func @transform_4(%arg0: i32) -> (i32, i32) {
    %c0_i32 = arith.constant 0 : i32
    %c0_i32_0 = arith.constant 0 : i32
    %c0_i32_1 = arith.constant 0 : i32
    return %c0_i32, %c0_i32_0 : i32, i32
  }
  func.func @transform_5(%arg0: i32) -> (i32, i32) {
    %c0_i32 = arith.constant 0 : i32
    %c0_i32_0 = arith.constant 0 : i32
    return %arg0, %c0_i32 : i32, i32
  }
}

</mosaic_0001>

<llo_original>
// kernel: tpu_custom_call.1
$region0: #{tpu_custom_call.1}
  #allocation0 [shape = 'u32[]', space=smem, size = 0x4, offset = 0x4, fixed_abs, tag = 'smem constant byte address 0x4 - core index']
  #allocation1 [shape = 'u32[144,128]{1,0:T(1,128)}', space=vmem, size = 0x12000, scoped, tag = 'internal scratch']
  %s0 = inlined_call_operand.vmem [shape: f32[200,32], index: 0, kind: input, shape index: {}]
  %s1 = inlined_call_operand.vmem [shape: bf16[32,128], index: 1, kind: input, shape index: {}]
  %s2 = inlined_call_operand.vmem [shape: f32[1,128], index: 2, kind: input, shape index: {}]
  %s3 = inlined_call_operand.vmem [shape: bf16[128,256], index: 3, kind: input, shape index: {}]
  %s4 = inlined_call_operand.vmem [shape: f32[1,256], index: 4, kind: input, shape index: {}]
  %s5 = inlined_call_operand.hbm [shape: f32[200,256], index: 5, kind: output, shape index: {}]
  %s6 = sld [smem:[#allocation0]]
  $region53: #{tpu_custom_call.1} parent=0
    _
  %s8 = ssub.s32 1, %s6
  %s9 = scalar_select 0, %s8, %s6
  $region1: #{tpu_custom_call.1} parent=0
    #allocation2 [shape = 'u8[262144]{0}', space=vmem, size = 0x40000, scoped, tag = 'output window, operand 0']
    #allocation3 [shape = 's32[2]{0}', space=sflag, size = 0x8, scoped, tag = 'scoped memory for tpu_custom_call.1']
    %10 = vsyncpa [#allocation3], 0
    %s11 = scalar_lea.sflag [#allocation3], 1
    %12 = vsyncpa %s11, 0
    loop: start=0, step=1, limit=4
    $region2: #{tpu_custom_call.1} parent=1 // loop_pre_header
      _
    $region3: #{tpu_custom_call.1} parent=1 // loop_header
      %s14 = sphi 0, %s18
      %p15 = scmp.ge.s32.totalorder %s14, 4
      %s24 = sphi 0, %s26
      %s27 = sphi 0, %s24
      %s28 = sphi 0, %s27
      %s44 = sphi 0, %s28
      %s48 = sphi 0, %s48
      %s50 = sphi 0, %s48
      %s51 = sphi 0, %s50
      %s65 = sphi 0, %s51
      %s69 = sphi 0, %s69
      %s71 = sphi 0, %s69
      %s72 = sphi 0, %s71
      %s86 = sphi 0, %s72
      %s90 = sphi 0, %s90
      %s92 = sphi 0, %s90
      %s93 = sphi 0, %s92
      %s107 = sphi 0, %s93
      %s111 = sphi 0, %s111
      %s113 = sphi 0, %s111
      %s114 = sphi 0, %s113
      %s128 = sphi 0, %s114
      %s134 = sphi 0, %s136
      %s137 = sphi 0, %s134
      %s138 = sphi 0, %s137
      %s154 = sphi 0, %s138
    $region4: #{tpu_custom_call.1} parent=1 // loop_header_branch
      %17 = sbr.rel (%p15) target = $region8
    $region5: #{tpu_custom_call.1} parent=1 // loop_body
      %s19 = ssub.s32 %s14, 1
      %s20 = ssub.s32 %s14, 2
      %s21 = sadd.s32 %s14, 1
      %s22 = ssub.s32 %s14, %s21
      %p23 = scmp.eq.s32.totalorder %s22, 0
      %s25 = sadd.s32 %s24, 1
      %s26 = scalar_select %p23, %s24, %s25
      %p29 = pneg %p23
      %p30 = scmp.eq.s32.totalorder %s14, 1
      %p31 = por %p29, %p30
      %p32 = scmp.ne.s32.totalorder %s24, %s27
      %p33 = scmp.eq.s32.totalorder %s14, 0
      %p34 = por %p32, %p33
      %p35 = scmp.ne.s32.totalorder %s24, %s27
      %p36 = scmp.eq.s32.totalorder %s19, 1
      %p37 = por %p35, %p36
      %p38 = scmp.ne.s32.totalorder %s27, %s28
      %p39 = scmp.eq.s32.totalorder %s19, 0
      %p40 = por %p38, %p39
      %p41 = scmp.ne.s32.totalorder %s27, %s28
      %p42 = scmp.eq.s32.totalorder %s20, 1
      %p43 = por %p41, %p42
      %p45 = scmp.ne.s32.totalorder %s28, %s44
      %p46 = scmp.eq.s32.totalorder %s20, 0
      %p47 = por %p45, %p46
      %s49 = sadd.s32 %s48, 1
      %p52 = scmp.eq.s32.totalorder %s14, 1
      %p53 = scmp.ne.s32.totalorder %s48, %s50
      %p54 = scmp.eq.s32.totalorder %s14, 0
      %p55 = por %p53, %p54
      %p56 = scmp.ne.s32.totalorder %s48, %s50
      %p57 = scmp.eq.s32.totalorder %s19, 1
      %p58 = por %p56, %p57
      %p59 = scmp.ne.s32.totalorder %s50, %s51
      %p60 = scmp.eq.s32.totalorder %s19, 0
      %p61 = por %p59, %p60
      %p62 = scmp.ne.s32.totalorder %s50, %s51
      %p63 = scmp.eq.s32.totalorder %s20, 1
      %p64 = por %p62, %p63
      %p66 = scmp.ne.s32.totalorder %s51, %s65
      %p67 = scmp.eq.s32.totalorder %s20, 0
      %p68 = por %p66, %p67
      %s70 = sadd.s32 %s69, 1
      %p73 = scmp.eq.s32.totalorder %s14, 1
      %p74 = scmp.ne.s32.totalorder %s69, %s71
      %p75 = scmp.eq.s32.totalorder %s14, 0
      %p76 = por %p74, %p75
      %p77 = scmp.ne.s32.totalorder %s69, %s71
      %p78 = scmp.eq.s32.totalorder %s19, 1
      %p79 = por %p77, %p78
      %p80 = scmp.ne.s32.totalorder %s71, %s72
      %p81 = scmp.eq.s32.totalorder %s19, 0
      %p82 = por %p80, %p81
      %p83 = scmp.ne.s32.totalorder %s71, %s72
      %p84 = scmp.eq.s32.totalorder %s20, 1
      %p85 = por %p83, %p84
      %p87 = scmp.ne.s32.totalorder %s72, %s86
      %p88 = scmp.eq.s32.totalorder %s20, 0
      %p89 = por %p87, %p88
      %s91 = sadd.s32 %s90, 1
      %p94 = scmp.eq.s32.totalorder %s14, 1
      %p95 = scmp.ne.s32.totalorder %s90, %s92
      %p96 = scmp.eq.s32.totalorder %s14, 0
      %p97 = por %p95, %p96
      %p98 = scmp.ne.s32.totalorder %s90, %s92
      %p99 = scmp.eq.s32.totalorder %s19, 1
      %p100 = por %p98, %p99
      %p101 = scmp.ne.s32.totalorder %s92, %s93
      %p102 = scmp.eq.s32.totalorder %s19, 0
      %p103 = por %p101, %p102
      %p104 = scmp.ne.s32.totalorder %s92, %s93
      %p105 = scmp.eq.s32.totalorder %s20, 1
      %p106 = por %p104, %p105
      %p108 = scmp.ne.s32.totalorder %s93, %s107
      %p109 = scmp.eq.s32.totalorder %s20, 0
      %p110 = por %p108, %p109
      %s112 = sadd.s32 %s111, 1
      %p115 = scmp.eq.s32.totalorder %s14, 1
      %p116 = scmp.ne.s32.totalorder %s111, %s113
      %p117 = scmp.eq.s32.totalorder %s14, 0
      %p118 = por %p116, %p117
      %p119 = scmp.ne.s32.totalorder %s111, %s113
      %p120 = scmp.eq.s32.totalorder %s19, 1
      %p121 = por %p119, %p120
      %p122 = scmp.ne.s32.totalorder %s113, %s114
      %p123 = scmp.eq.s32.totalorder %s19, 0
      %p124 = por %p122, %p123
      %p125 = scmp.ne.s32.totalorder %s113, %s114
      %p126 = scmp.eq.s32.totalorder %s20, 1
      %p127 = por %p125, %p126
      %p129 = scmp.ne.s32.totalorder %s114, %s128
      %p130 = scmp.eq.s32.totalorder %s20, 0
      %p131 = por %p129, %p130
      %s132 = ssub.s32 %s14, %s21
      %p133 = scmp.eq.s32.totalorder %s132, 0
      %s135 = sadd.s32 %s134, 1
      %s136 = scalar_select %p133, %s134, %s135
      %p139 = pneg %p133
      %p140 = scmp.eq.s32.totalorder %s14, 1
      %p141 = por %p139, %p140
      %p142 = scmp.ne.s32.totalorder %s134, %s137
      %p143 = scmp.eq.s32.totalorder %s14, 0
      %p144 = por %p142, %p143
      %p145 = scmp.ne.s32.totalorder %s134, %s137
      %p146 = scmp.eq.s32.totalorder %s19, 1
      %p147 = por %p145, %p146
      %p148 = scmp.ne.s32.totalorder %s137, %s138
      %p149 = scmp.eq.s32.totalorder %s19, 0
      %p150 = por %p148, %p149
      %p151 = scmp.ne.s32.totalorder %s137, %s138
      %p152 = scmp.eq.s32.totalorder %s20, 1
      %p153 = por %p151, %p152
      %p155 = scmp.ne.s32.totalorder %s138, %s154
      %p156 = scmp.eq.s32.totalorder %s20, 0
      %p157 = por %p155, %p156
      %p158 = scmp.le.s32.totalorder 1, %s14
      %p159 = scmp.lt.s32.totalorder %s14, 3
      %p160 = pnand %p158, %p159
      %p161 = pneg %p160
      // Predicated region
      $region9: #{tpu_custom_call.1} parent=5 // pred_check
        _
      $region10: #{tpu_custom_call.1} parent=5 // pred_check_branch
        %163 = sbr.rel (%p160) target = $region12
      $region11: #{tpu_custom_call.1} parent=5 // pred_region
        %s164 = ssub.s32 %s14, 1
        // Predicated region
        $region13: #{tpu_custom_call.1} parent=11 // pred_check
          %p165 = pneg %p61
        $region14: #{tpu_custom_call.1} parent=11 // pred_check_branch
          %167 = sbr.rel (%p165) target = $region16
        $region15: #{tpu_custom_call.1} parent=11 // pred_region
          _
        $region16: #{tpu_custom_call.1} parent=11 // pred_fallthru
          _
        // Predicated region
        $region17: #{tpu_custom_call.1} parent=11 // pred_check
          %p168 = pneg %p82
        $region18: #{tpu_custom_call.1} parent=11 // pred_check_branch
          %170 = sbr.rel (%p168) target = $region20
        $region19: #{tpu_custom_call.1} parent=11 // pred_region
          _
        $region20: #{tpu_custom_call.1} parent=11 // pred_fallthru
          _
        // Predicated region
        $region21: #{tpu_custom_call.1} parent=11 // pred_check
          %p171 = pneg %p103
        $region22: #{tpu_custom_call.1} parent=11 // pred_check_branch
          %173 = sbr.rel (%p171) target = $region24
        $region23: #{tpu_custom_call.1} parent=11 // pred_region
          _
        $region24: #{tpu_custom_call.1} parent=11 // pred_fallthru
          _
        // Predicated region
        $region25: #{tpu_custom_call.1} parent=11 // pred_check
          %p174 = pneg %p124
        $region26: #{tpu_custom_call.1} parent=11 // pred_check_branch
          %176 = sbr.rel (%p174) target = $region28
        $region27: #{tpu_custom_call.1} parent=11 // pred_region
          _
        $region28: #{tpu_custom_call.1} parent=11 // pred_fallthru
          _
      $region12: #{tpu_custom_call.1} parent=5 // pred_fallthru
        _
      %p177 = scmp.lt.s32.totalorder %s14, 2
      // Predicated region
      $region29: #{tpu_custom_call.1} parent=5 // pred_check
        %p178 = pneg %p177
      $region30: #{tpu_custom_call.1} parent=5 // pred_check_branch
        %180 = sbr.rel (%p178) target = $region32
      $region31: #{tpu_custom_call.1} parent=5 // pred_region
        // Predicated region
        $region33: #{tpu_custom_call.1} parent=31 // pred_check
          %p181 = pneg %p34
        $region34: #{tpu_custom_call.1} parent=31 // pred_check_branch
          %183 = sbr.rel (%p181) target = $region36
        $region35: #{tpu_custom_call.1} parent=31 // pred_region
          %s184 = smul.u32 16, %s14
          %s185 = ssub.s32 25, %s184
          %p186 = scmp.lt.s32.totalorder %s185, 16
          %s187 = scalar_select %p186, %s185, 16
          %s188 = smul.u32 128, %s187
          %p189 = scmp.lt.s32.totalorder %s184, 24
          %s190 = scalar_select %p189, %s184, 24
          %s191 = smul.addr %s190, 8
          %s192 = scalar_lea.vmem %s0, %s191
          %s193 = smul.u32 16, %s14
          %s194 = ssub.s32 25, %s193
          %p195 = scmp.lt.s32.totalorder %s194, 16
          %s196 = scalar_select %p195, %s194, 16
          %s197 = smul.u32 128, %s196
        $region36: #{tpu_custom_call.1} parent=31 // pred_fallthru
          _
      $region32: #{tpu_custom_call.1} parent=5 // pred_fallthru
        _
      %p198 = scmp.le.s32.totalorder 1, %s14
      %p199 = scmp.lt.s32.totalorder %s14, 3
      %p200 = pnand %p198, %p199
      %p201 = pneg %p200
      // Predicated region
      $region37: #{tpu_custom_call.1} parent=5 // pred_check
        _
      $region38: #{tpu_custom_call.1} parent=5 // pred_check_branch
        %203 = sbr.rel (%p200) target = $region40
      $region39: #{tpu_custom_call.1} parent=5 // pred_region
        %s204 = ssub.s32 %s14, 1
        %s205 = smul.u32 16, %s19
        %s206 = ssub.s32 25, %s205
        %p207 = scmp.lt.s32.totalorder %s206, 16
        %s208 = scalar_select %p207, %s206, 16
        %s209 = smul.u32 128, %s208
        %p210 = scmp.lt.s32.totalorder %s205, 24
        %s211 = scalar_select %p210, %s205, 24
        %s212 = smul.addr %s211, 8
        %s213 = scalar_lea.vmem %s0, %s212
        %p214 = pneg %p40
        %p215 = pneg %p37
        %p216 = pneg %p61
        %p217 = pneg %p58
        %p218 = pneg %p82
        %p219 = pneg %p79
        %p220 = pneg %p103
        %p221 = pneg %p100
        %p222 = pneg %p124
        %p223 = pneg %p121
        %p224 = pneg %p150
        %p225 = pneg %p147
        %s226 = sand.u32 %s137, 1
        %s227 = scalar_lea.sflag [#allocation3], %s226
        %s228 = sand.u32 %s137, 1
        %s229 = smul.addr %s228, 256
        %s230 = scalar_lea.vmem [#allocation2], %s229
        %s231 = smul.u32 16, %s19
        %s232 = ssub.s32 25, %s231
        %p233 = scmp.lt.s32.totalorder %s232, 16
        %s234 = scalar_select %p233, %s232, 16
        %s235 = smul.u32 128, %s234
        %p236 = scmp.lt.s32.totalorder %s231, 24
        %s237 = scalar_select %p236, %s231, 24
        %s238 = smul.addr %s237, 8
        %s239 = scalar_lea.vmem %s0, %s238
        %s240 = smul.u32 16, %s19
        %s241 = ssub.s32 25, %s240
        %p242 = scmp.lt.s32.totalorder %s241, 16
        %s243 = scalar_select %p242, %s241, 16
        %s244 = smul.u32 128, %s243
        %s245 = smul.u32 16, %s19
        %s246 = ssub.s32 25, %s245
        %p247 = scmp.lt.s32.totalorder %s246, 16
        %s248 = scalar_select %p247, %s246, 16
        %s249 = smul.u32 128, %s248
        %s250 = smul.u32 %s249, 2
        %v252 = vld [vmem:[%s239] sm:$0xff]
        %v253 = vld [vmem:[%s239 + $0x8] sm:$0xff]
        %v254 = vld [vmem:[%s239 + $0x10] sm:$0xff]
        %v255 = vld [vmem:[%s239 + $0x18] sm:$0xff]
        %v256 = vld [vmem:[%s239 + $0x20] sm:$0xff]
        %v257 = vld [vmem:[%s239 + $0x28] sm:$0xff]
        %v258 = vld [vmem:[%s239 + $0x30] sm:$0xff]
        %v259 = vld [vmem:[%s239 + $0x38] sm:$0xff]
        %v260 = vld [vmem:[%s239 + $0x40] sm:$0xff]
        %v261 = vld [vmem:[%s239 + $0x48] sm:$0xff]
        %v262 = vld [vmem:[%s239 + $0x50] sm:$0xff]
        %v263 = vld [vmem:[%s239 + $0x58] sm:$0xff]
        %v264 = vld [vmem:[%s239 + $0x60] sm:$0xff]
        %v265 = vld [vmem:[%s239 + $0x68] sm:$0xff]
        %v266 = vld [vmem:[%s239 + $0x70] sm:$0xff]
        %v267 = vld [vmem:[%s239 + $0x78] sm:$0xff]
        %v268 = vpack.c.bf16 %v253, %v252
        %v269 = vpack.c.bf16 %v255, %v254
        %v270 = vpack.c.bf16 %v257, %v256
        %v271 = vpack.c.bf16 %v259, %v258
        %v272 = vpack.c.bf16 %v261, %v260
        %v273 = vpack.c.bf16 %v263, %v262
        %v274 = vpack.c.bf16 %v265, %v264
        %v275 = vpack.c.bf16 %v267, %v266
        %v276 = vld [vmem:[%s1] sm:$0xf]
        %v277 = vld [vmem:[%s1 + $0x4] sm:$0xf]
        %v278 = vld [vmem:[%s1 + $0x8] sm:$0xf]
        %v279 = vld [vmem:[%s1 + $0xc] sm:$0xf]
        %v280 = vld [vmem:[%s2] sm:$0x1]
        %v282 = vlaneseq
        %v283 = vshrl.u32 %v282, 7
        %v284 = vsub.s32 0, %v283
        %v285 = vrot.slane %v280, %v284
        %v291 = vunpack.c.l.b16 %v276
        %v292 = vunpack.c.l.b16 %v277
        %v293 = vunpack.c.l.b16 %v278
        %v294 = vunpack.c.l.b16 %v279
        %v295 = vpack.c.b16 %v292, %v291
        %v296 = vpack.c.b16 %v294, %v293
        %vm299 = vcmask 261120
        %v301 = vsel %vm299, %v268, 0
        %v304 = vsel %vm299, %v269, 0
        %v307 = vsel %vm299, %v270, 0
        %v310 = vsel %vm299, %v271, 0
        %v313 = vsel %vm299, %v272, 0
        %v316 = vsel %vm299, %v273, 0
        %v319 = vsel %vm299, %v274, 0
        %v322 = vsel %vm299, %v275, 0
        %324 = vmatprep.subr.bf16.mxu0 0
        %325 = vmatpush1.bf16.msra.mxu0 0
        %326 = vmatprep.subr.bf16.mxu0 0
        %327 = vmatpush1.bf16.msra.mxu0 0
        %328 = vmatprep.subr.bf16.mxu0 0
        %329 = vmatpush1.bf16.msra.mxu0 0
        %330 = vmatprep.subr.bf16.mxu0 0
        %331 = vmatpush1.bf16.msra.mxu0 0
        %332 = vmatprep.subr.bf16.mxu0 0
        %333 = vmatpush1.bf16.msra.mxu0 0
        %334 = vmatprep.subr.bf16.mxu0 0
        %335 = vmatpush1.bf16.msra.mxu0 0
        %336 = vmatprep.subr.bf16.mxu0 0
        %337 = vmatpush1.bf16.msra.mxu0 %v296
        %338 = vmatprep.subr.bf16.mxu0 0
        %339 = vmatpush1.bf16.msra.mxu0 %v295
        %340 = vmatprep.subr.bf16.mxu0 0
        %341 = vmatpush2.bf16.msra.mxu0 0
        %342 = vmatprep.subr.bf16.mxu0 0
        %343 = vmatpush2.bf16.msra.mxu0 0
        %344 = vmatprep.subr.bf16.mxu0 0
        %345 = vmatpush2.bf16.msra.mxu0 0
        %346 = vmatprep.subr.bf16.mxu0 0
        %347 = vmatpush2.bf16.msra.mxu0 0
        %348 = vmatprep.subr.bf16.mxu0 0
        %349 = vmatpush2.bf16.msra.mxu0 0
        %350 = vmatprep.subr.bf16.mxu0 0
        %351 = vmatpush2.bf16.msra.mxu0 0
        %352 = vmatprep.subr.bf16.mxu0 0
        %353 = vmatpush2.bf16.msra.mxu0 0
        %354 = vmatprep.subr.bf16.mxu0 0
        %355 = vmatpush2.bf16.msra.mxu0 0
        %356 = vmatprep.mubr.bf16.mxu0 0
        %357 = vmatmul.mubr.bf16.gmra.mxu0 %v301
        %v358 = vpop.f32.mrf.mxu0
        %v359 = vadd.f32 %v285, %v358
        %v360 = vpop.f32.mrf.mxu0
        %v361 = vpop.f32.mrf.mxu0
        %v362 = vadd.f32 %v285, %v361
        %v363 = vpop.f32.mrf.mxu0
        %364 = vmatprep.mubr.bf16.mxu0 0
        %365 = vmatmul.mubr.bf16.gmra.mxu0 %v304
        %v366 = vpop.f32.mrf.mxu0
        %v367 = vadd.f32 %v285, %v366
        %v368 = vpop.f32.mrf.mxu0
        %v369 = vpop.f32.mrf.mxu0
        %v370 = vadd.f32 %v285, %v369
        %v371 = vpop.f32.mrf.mxu0
        %372 = vmatprep.mubr.bf16.mxu0 0
        %373 = vmatmul.mubr.bf16.gmra.mxu0 %v307
        %v374 = vpop.f32.mrf.mxu0
        %v375 = vadd.f32 %v285, %v374
        %v376 = vpop.f32.mrf.mxu0
        %v377 = vpop.f32.mrf.mxu0
        %v378 = vadd.f32 %v285, %v377
        %v379 = vpop.f32.mrf.mxu0
        %380 = vmatprep.mubr.bf16.mxu0 0
        %381 = vmatmul.mubr.bf16.gmra.mxu0 %v310
        %v382 = vpop.f32.mrf.mxu0
        %v383 = vadd.f32 %v285, %v382
        %v384 = vpop.f32.mrf.mxu0
        %v385 = vpop.f32.mrf.mxu0
        %v386 = vadd.f32 %v285, %v385
        %v387 = vpop.f32.mrf.mxu0
        %388 = vmatprep.mubr.bf16.mxu0 0
        %389 = vmatmul.mubr.bf16.gmra.mxu0 %v313
        %v390 = vpop.f32.mrf.mxu0
        %v391 = vadd.f32 %v285, %v390
        %v392 = vpop.f32.mrf.mxu0
        %v393 = vpop.f32.mrf.mxu0
        %v394 = vadd.f32 %v285, %v393
        %v395 = vpop.f32.mrf.mxu0
        %396 = vmatprep.mubr.bf16.mxu0 0
        %397 = vmatmul.mubr.bf16.gmra.mxu0 %v316
        %v398 = vpop.f32.mrf.mxu0
        %v399 = vadd.f32 %v285, %v398
        %v400 = vpop.f32.mrf.mxu0
        %v401 = vpop.f32.mrf.mxu0
        %v402 = vadd.f32 %v285, %v401
        %v403 = vpop.f32.mrf.mxu0
        %404 = vmatprep.mubr.bf16.mxu0 0
        %405 = vmatmul.mubr.bf16.gmra.mxu0 %v319
        %v406 = vpop.f32.mrf.mxu0
        %v407 = vadd.f32 %v285, %v406
        %v408 = vpop.f32.mrf.mxu0
        %v409 = vpop.f32.mrf.mxu0
        %v410 = vadd.f32 %v285, %v409
        %v411 = vpop.f32.mrf.mxu0
        %412 = vmatprep.mubr.bf16.mxu0 0
        %413 = vmatmul.mubr.bf16.gmra.mxu0 %v322
        %v414 = vpop.f32.mrf.mxu0
        %v415 = vadd.f32 %v285, %v414
        %v416 = vpop.f32.mrf.mxu0
        %v417 = vpop.f32.mrf.mxu0
        %v418 = vadd.f32 %v285, %v417
        %v419 = vpop.f32.mrf.mxu0
        %420 = vdwg.mxu0
        %v421 = vmax.f32 %v359, 0.0
        %v422 = vmax.f32 %v362, 0.0
        %v423 = vmax.f32 %v367, 0.0
        %v424 = vmax.f32 %v370, 0.0
        %v425 = vmax.f32 %v375, 0.0
        %v426 = vmax.f32 %v378, 0.0
        %v427 = vmax.f32 %v383, 0.0
        %v428 = vmax.f32 %v386, 0.0
        %v429 = vmax.f32 %v391, 0.0
        %v430 = vmax.f32 %v394, 0.0
        %v431 = vmax.f32 %v399, 0.0
        %v432 = vmax.f32 %v402, 0.0
        %v433 = vmax.f32 %v407, 0.0
        %v434 = vmax.f32 %v410, 0.0
        %v435 = vmax.f32 %v415, 0.0
        %v436 = vmax.f32 %v418, 0.0
        %v437 = vpack.c.bf16 %v422, %v421
        %v438 = vpack.c.bf16 %v424, %v423
        %v439 = vpack.c.bf16 %v426, %v425
        %v440 = vpack.c.bf16 %v428, %v427
        %v441 = vpack.c.bf16 %v430, %v429
        %v442 = vpack.c.bf16 %v432, %v431
        %v443 = vpack.c.bf16 %v434, %v433
        %v444 = vpack.c.bf16 %v436, %v435
        %v445 = vld [vmem:[%s3] sm:$0xff]
        %v446 = vld [vmem:[%s3 + $0x8] sm:$0xff]
        %v447 = vld [vmem:[%s3 + $0x10] sm:$0xff]
        %v448 = vld [vmem:[%s3 + $0x18] sm:$0xff]
        %v449 = vld [vmem:[%s3 + $0x20] sm:$0xff]
        %v450 = vld [vmem:[%s3 + $0x28] sm:$0xff]
        %v451 = vld [vmem:[%s3 + $0x30] sm:$0xff]
        %v452 = vld [vmem:[%s3 + $0x38] sm:$0xff]
        %v453 = vld [vmem:[%s3 + $0x40] sm:$0xff]
        %v454 = vld [vmem:[%s3 + $0x48] sm:$0xff]
        %v455 = vld [vmem:[%s3 + $0x50] sm:$0xff]
        %v456 = vld [vmem:[%s3 + $0x58] sm:$0xff]
        %v457 = vld [vmem:[%s3 + $0x60] sm:$0xff]
        %v458 = vld [vmem:[%s3 + $0x68] sm:$0xff]
        %v459 = vld [vmem:[%s3 + $0x70] sm:$0xff]
        %v460 = vld [vmem:[%s3 + $0x78] sm:$0xff]
        %v461 = vld [vmem:[%s4] sm:$0x3]
        %v463 = vlaneseq
        %v464 = vshrl.u32 %v463, 7
        %v465 = vsub.s32 0, %v464
        %v466 = vrot.slane %v461, %v465
        %v467 = vlaneseq
        %v468 = vshrl.u32 %v467, 7
        %v469 = vsub.s32 1, %v468
        %v470 = vrot.slane %v461, %v469
        %v489 = vunpack.c.l.b16 %v445
        %v490 = vunpack.c.h.b16 %v445
        %v491 = vunpack.c.l.b16 %v446
        %v492 = vunpack.c.h.b16 %v446
        %v493 = vunpack.c.l.b16 %v447
        %v494 = vunpack.c.h.b16 %v447
        %v495 = vunpack.c.l.b16 %v448
        %v496 = vunpack.c.h.b16 %v448
        %v497 = vunpack.c.l.b16 %v449
        %v498 = vunpack.c.h.b16 %v449
        %v499 = vunpack.c.l.b16 %v450
        %v500 = vunpack.c.h.b16 %v450
        %v501 = vunpack.c.l.b16 %v451
        %v502 = vunpack.c.h.b16 %v451
        %v503 = vunpack.c.l.b16 %v452
        %v504 = vunpack.c.h.b16 %v452
        %v505 = vunpack.c.l.b16 %v453
        %v506 = vunpack.c.h.b16 %v453
        %v507 = vunpack.c.l.b16 %v454
        %v508 = vunpack.c.h.b16 %v454
        %v509 = vunpack.c.l.b16 %v455
        %v510 = vunpack.c.h.b16 %v455
        %v511 = vunpack.c.l.b16 %v456
        %v512 = vunpack.c.h.b16 %v456
        %v513 = vunpack.c.l.b16 %v457
        %v514 = vunpack.c.h.b16 %v457
        %v515 = vunpack.c.l.b16 %v458
        %v516 = vunpack.c.h.b16 %v458
        %v517 = vunpack.c.l.b16 %v459
        %v518 = vunpack.c.h.b16 %v459
        %v519 = vunpack.c.l.b16 %v460
        %v520 = vunpack.c.h.b16 %v460
        %v521 = vpack.c.b16 %v491, %v489
        %v522 = vpack.c.b16 %v492, %v490
        %v523 = vpack.c.b16 %v495, %v493
        %v524 = vpack.c.b16 %v496, %v494
        %v525 = vpack.c.b16 %v499, %v497
        %v526 = vpack.c.b16 %v500, %v498
        %v527 = vpack.c.b16 %v503, %v501
        %v528 = vpack.c.b16 %v504, %v502
        %v529 = vpack.c.b16 %v507, %v505
        %v530 = vpack.c.b16 %v508, %v506
        %v531 = vpack.c.b16 %v511, %v509
        %v532 = vpack.c.b16 %v512, %v510
        %v533 = vpack.c.b16 %v515, %v513
        %v534 = vpack.c.b16 %v516, %v514
        %v535 = vpack.c.b16 %v519, %v517
        %v536 = vpack.c.b16 %v520, %v518
        %553 = vmatprep.subr.bf16.mxu0 %v536
        %554 = vmatpush1.bf16.msra.mxu0 %v535
        %555 = vmatprep.subr.bf16.mxu0 %v534
        %556 = vmatpush1.bf16.msra.mxu0 %v533
        %557 = vmatprep.subr.bf16.mxu0 %v532
        %558 = vmatpush1.bf16.msra.mxu0 %v531
        %559 = vmatprep.subr.bf16.mxu0 %v530
        %560 = vmatpush1.bf16.msra.mxu0 %v529
        %561 = vmatprep.subr.bf16.mxu0 %v528
        %562 = vmatpush1.bf16.msra.mxu0 %v527
        %563 = vmatprep.subr.bf16.mxu0 %v526
        %564 = vmatpush1.bf16.msra.mxu0 %v525
        %565 = vmatprep.subr.bf16.mxu0 %v524
        %566 = vmatpush1.bf16.msra.mxu0 %v523
        %567 = vmatprep.subr.bf16.mxu0 %v522
        %568 = vmatpush1.bf16.msra.mxu0 %v521
        %569 = vmatprep.subr.bf16.mxu0 0
        %570 = vmatpush2.bf16.msra.mxu0 0
        %571 = vmatprep.subr.bf16.mxu0 0
        %572 = vmatpush2.bf16.msra.mxu0 0
        %573 = vmatprep.subr.bf16.mxu0 0
        %574 = vmatpush2.bf16.msra.mxu0 0
        %575 = vmatprep.subr.bf16.mxu0 0
        %576 = vmatpush2.bf16.msra.mxu0 0
        %577 = vmatprep.subr.bf16.mxu0 0
        %578 = vmatpush2.bf16.msra.mxu0 0
        %579 = vmatprep.subr.bf16.mxu0 0
        %580 = vmatpush2.bf16.msra.mxu0 0
        %581 = vmatprep.subr.bf16.mxu0 0
        %582 = vmatpush2.bf16.msra.mxu0 0
        %583 = vmatprep.subr.bf16.mxu0 0
        %584 = vmatpush2.bf16.msra.mxu0 0
        %585 = vmatprep.mubr.bf16.mxu0 0
        %586 = vmatmul.mubr.bf16.gmra.mxu0 %v437
        %v587 = vpop.f32.mrf.mxu0
        %v588 = vadd.f32 %v466, %v587
        %v589 = vpop.f32.mrf.mxu0
        %v590 = vadd.f32 %v470, %v589
        %v591 = vpop.f32.mrf.mxu0
        %v592 = vadd.f32 %v466, %v591
        %v593 = vpop.f32.mrf.mxu0
        %v594 = vadd.f32 %v470, %v593
        %595 = vmatprep.mubr.bf16.mxu0 0
        %596 = vmatmul.mubr.bf16.gmra.mxu0 %v438
        %v597 = vpop.f32.mrf.mxu0
        %v598 = vadd.f32 %v466, %v597
        %v599 = vpop.f32.mrf.mxu0
        %v600 = vadd.f32 %v470, %v599
        %v601 = vpop.f32.mrf.mxu0
        %v602 = vadd.f32 %v466, %v601
        %v603 = vpop.f32.mrf.mxu0
        %v604 = vadd.f32 %v470, %v603
        %605 = vmatprep.mubr.bf16.mxu0 0
        %606 = vmatmul.mubr.bf16.gmra.mxu0 %v439
        %v607 = vpop.f32.mrf.mxu0
        %v608 = vadd.f32 %v466, %v607
        %v609 = vpop.f32.mrf.mxu0
        %v610 = vadd.f32 %v470, %v609
        %v611 = vpop.f32.mrf.mxu0
        %v612 = vadd.f32 %v466, %v611
        %v613 = vpop.f32.mrf.mxu0
        %v614 = vadd.f32 %v470, %v613
        %615 = vmatprep.mubr.bf16.mxu0 0
        %616 = vmatmul.mubr.bf16.gmra.mxu0 %v440
        %v617 = vpop.f32.mrf.mxu0
        %v618 = vadd.f32 %v466, %v617
        %v619 = vpop.f32.mrf.mxu0
        %v620 = vadd.f32 %v470, %v619
        %v621 = vpop.f32.mrf.mxu0
        %v622 = vadd.f32 %v466, %v621
        %v623 = vpop.f32.mrf.mxu0
        %v624 = vadd.f32 %v470, %v623
        %625 = vmatprep.mubr.bf16.mxu0 0
        %626 = vmatmul.mubr.bf16.gmra.mxu0 %v441
        %v627 = vpop.f32.mrf.mxu0
        %v628 = vadd.f32 %v466, %v627
        %v629 = vpop.f32.mrf.mxu0
        %v630 = vadd.f32 %v470, %v629
        %v631 = vpop.f32.mrf.mxu0
        %v632 = vadd.f32 %v466, %v631
        %v633 = vpop.f32.mrf.mxu0
        %v634 = vadd.f32 %v470, %v633
        %635 = vmatprep.mubr.bf16.mxu0 0
        %636 = vmatmul.mubr.bf16.gmra.mxu0 %v442
        %v637 = vpop.f32.mrf.mxu0
        %v638 = vadd.f32 %v466, %v637
        %v639 = vpop.f32.mrf.mxu0
        %v640 = vadd.f32 %v470, %v639
        %v641 = vpop.f32.mrf.mxu0
        %v642 = vadd.f32 %v466, %v641
        %v643 = vpop.f32.mrf.mxu0
        %v644 = vadd.f32 %v470, %v643
        %645 = vmatprep.mubr.bf16.mxu0 0
        %646 = vmatmul.mubr.bf16.gmra.mxu0 %v443
        %v647 = vpop.f32.mrf.mxu0
        %v648 = vadd.f32 %v466, %v647
        %v649 = vpop.f32.mrf.mxu0
        %v650 = vadd.f32 %v470, %v649
        %v651 = vpop.f32.mrf.mxu0
        %v652 = vadd.f32 %v466, %v651
        %v653 = vpop.f32.mrf.mxu0
        %v654 = vadd.f32 %v470, %v653
        %655 = vmatprep.mubr.bf16.mxu0 0
        %656 = vmatmul.mubr.bf16.gmra.mxu0 %v444
        %v657 = vpop.f32.mrf.mxu0
        %v658 = vadd.f32 %v466, %v657
        %v659 = vpop.f32.mrf.mxu0
        %v660 = vadd.f32 %v470, %v659
        %v661 = vpop.f32.mrf.mxu0
        %v662 = vadd.f32 %v466, %v661
        %v663 = vpop.f32.mrf.mxu0
        %v664 = vadd.f32 %v470, %v663
        %665 = vdwg.mxu0
        %666 = vst [vmem:[%s230] sm:$0xff] %v588
        %667 = vst [vmem:[%s230 + $0x8] sm:$0xff] %v590
        %668 = vst [vmem:[%s230 + $0x10] sm:$0xff] %v592
        %669 = vst [vmem:[%s230 + $0x18] sm:$0xff] %v594
        %670 = vst [vmem:[%s230 + $0x20] sm:$0xff] %v598
        %671 = vst [vmem:[%s230 + $0x28] sm:$0xff] %v600
        %672 = vst [vmem:[%s230 + $0x30] sm:$0xff] %v602
        %673 = vst [vmem:[%s230 + $0x38] sm:$0xff] %v604
        %674 = vst [vmem:[%s230 + $0x40] sm:$0xff] %v608
        %675 = vst [vmem:[%s230 + $0x48] sm:$0xff] %v610
        %676 = vst [vmem:[%s230 + $0x50] sm:$0xff] %v612
        %677 = vst [vmem:[%s230 + $0x58] sm:$0xff] %v614
        %678 = vst [vmem:[%s230 + $0x60] sm:$0xff] %v618
        %679 = vst [vmem:[%s230 + $0x68] sm:$0xff] %v620
        %680 = vst [vmem:[%s230 + $0x70] sm:$0xff] %v622
        %681 = vst [vmem:[%s230 + $0x78] sm:$0xff] %v624
        %682 = vst [vmem:[%s230 + $0x80] sm:$0xff] %v628
        %683 = vst [vmem:[%s230 + $0x88] sm:$0xff] %v630
        %684 = vst [vmem:[%s230 + $0x90] sm:$0xff] %v632
        %685 = vst [vmem:[%s230 + $0x98] sm:$0xff] %v634
        %686 = vst [vmem:[%s230 + $0xa0] sm:$0xff] %v638
        %687 = vst [vmem:[%s230 + $0xa8] sm:$0xff] %v640
        %688 = vst [vmem:[%s230 + $0xb0] sm:$0xff] %v642
        %689 = vst [vmem:[%s230 + $0xb8] sm:$0xff] %v644
        %690 = vst [vmem:[%s230 + $0xc0] sm:$0xff] %v648
        %691 = vst [vmem:[%s230 + $0xc8] sm:$0xff] %v650
        %692 = vst [vmem:[%s230 + $0xd0] sm:$0xff] %v652
        %693 = vst [vmem:[%s230 + $0xd8] sm:$0xff] %v654
        %694 = vst [vmem:[%s230 + $0xe0] sm:$0xff] %v658
        %695 = vst [vmem:[%s230 + $0xe8] sm:$0xff] %v660
        %696 = vst [vmem:[%s230 + $0xf0] sm:$0xff] %v662
        %697 = vst [vmem:[%s230 + $0xf8] sm:$0xff] %v664
        %s698 = sand.u32 %s137, 1
        %s699 = scalar_lea.sflag [#allocation3], %s698
        %s700 = sand.u32 %s137, 1
        %s701 = smul.addr %s700, 256
        %s702 = scalar_lea.vmem [#allocation2], %s701
        // Predicated region
        $region41: #{tpu_custom_call.1} parent=39 // pred_check
          %p703 = pneg %p147
        $region42: #{tpu_custom_call.1} parent=39 // pred_check_branch
          %705 = sbr.rel (%p703) target = $region44
        $region43: #{tpu_custom_call.1} parent=39 // pred_region
          %s706 = smul.u32 16, %s19
          %s707 = ssub.s32 25, %s706
          %p708 = scmp.lt.s32.totalorder %s707, 16
          %s709 = scalar_select %p708, %s707, 16
          %s710 = smul.u32 128, %s709
          %s711 = smul.u32 %s710, 2
          %s713 = ssub.s32 4096, %s711
          %714 = vsyncadd %s699, %s713
          %p715 = scmp.ne.s32.totalorder 0, %s711
          %s716 = smul.addr %s706, 2
          %s717 = smul.addr %s716, 128
          %s718 = scalar_lea.hbm %s5, %s717
          %s719 = smul.u32 16, %s709
          %s720 = sshll.u32 %s702, 4
          %s721 = int_to_ptr.vmem [resolvable:$true] %s720
          %s722 = sshll.u32 %s719, 4
          %726 = dma.vmem_to_hbm [thread:$0]  (%p715), %s721, %s722, %s718, %s699, 256, 256, 16
        $region44: #{tpu_custom_call.1} parent=39 // pred_fallthru
          _
      $region40: #{tpu_custom_call.1} parent=5 // pred_fallthru
        _
      %p727 = scmp.le.s32.totalorder 2, %s14
      // Predicated region
      $region45: #{tpu_custom_call.1} parent=5 // pred_check
        %p728 = pneg %p727
      $region46: #{tpu_custom_call.1} parent=5 // pred_check_branch
        %730 = sbr.rel (%p728) target = $region48
      $region47: #{tpu_custom_call.1} parent=5 // pred_region
        %s731 = ssub.s32 %s14, 2
        // Predicated region
        $region49: #{tpu_custom_call.1} parent=47 // pred_check
          %p732 = pneg %p153
        $region50: #{tpu_custom_call.1} parent=47 // pred_check_branch
          %734 = sbr.rel (%p732) target = $region52
        $region51: #{tpu_custom_call.1} parent=47 // pred_region
          %s735 = sand.u32 %s138, 1
          %s736 = scalar_lea.sflag [#allocation3], %s735
          %s737 = sand.u32 %s138, 1
          %s738 = smul.addr %s737, 256
          %s739 = scalar_lea.vmem [#allocation2], %s738
          %740 = dma.done %s736, 4096
        $region52: #{tpu_custom_call.1} parent=47 // pred_fallthru
          _
      $region48: #{tpu_custom_call.1} parent=5 // pred_fallthru
        _
    $region6: #{tpu_custom_call.1} parent=1 // loop_footer
      %s18 = sadd.s32 1, %s14
    $region7: #{tpu_custom_call.1} parent=1 // loop_footer_branch
      %13 = sbr.rel target = $region3
    $region8: #{tpu_custom_call.1} parent=1 // loop_exit
      _
    %741 = vsyncpa [#allocation3], 1
    %s742 = scalar_lea.sflag [#allocation3], 1
    %743 = vsyncpa %s742, 1

// kernel: tpu_custom_call.1
$region0: #{tpu_custom_call.1}
  #allocation0 [shape = 'u32[]', space=smem, size = 0x4, offset = 0x4, fixed_abs, tag = 'smem constant byte address 0x4 - core index']
  #allocation1 [shape = 'u32[144,128]{1,0:T(1,128)}', space=vmem, size = 0x12000, scoped, tag = 'internal scratch']
  %s0 = inlined_call_operand.vmem [shape: f32[200,32], index: 0, kind: input, shape index: {}]
  %s1 = inlined_call_operand.vmem [shape: bf16[32,128], index: 1, kind: input, shape index: {}]
  %s2 = inlined_call_operand.vmem [shape: f32[1,128], index: 2, kind: input, shape index: {}]
  %s3 = inlined_call_operand.vmem [shape: bf16[128,256], index: 3, kind: input, shape index: {}]
  %s4 = inlined_call_operand.vmem [shape: f32[1,256], index: 4, kind: input, shape index: {}]
  %s5 = inlined_call_operand.hbm [shape: f32[200,256], index: 5, kind: output, shape index: {}]
  %s6 = sld [smem:[#allocation0]]
  $region53: #{tpu_custom_call.1} parent=0
    _
  %s8 = ssub.s32 1, %s6
  %s9 = scalar_select 0, %s8, %s6
  $region1: #{tpu_custom_call.1} parent=0
    #allocation2 [shape = 'u8[262144]{0}', space=vmem, size = 0x40000, scoped, tag = 'output window, operand 0']
    #allocation3 [shape = 's32[2]{0}', space=sflag, size = 0x8, scoped, tag = 'scoped memory for tpu_custom_call.1']
    %10 = vsyncpa [#allocation3], 0
    %s11 = scalar_lea.sflag [#allocation3], 1
    %12 = vsyncpa %s11, 0
    loop: start=0, step=1, limit=4
    $region2: #{tpu_custom_call.1} parent=1 // loop_pre_header
      _
    $region3: #{tpu_custom_call.1} parent=1 // loop_header
      %s14 = sphi 0, %s18
      %p15 = scmp.ge.s32.totalorder %s14, 4
      %s24 = sphi 0, %s26
      %s27 = sphi 0, %s24
      %s28 = sphi 0, %s27
      %s44 = sphi 0, %s28
      %s48 = sphi 0, %s48
      %s50 = sphi 0, %s48
      %s51 = sphi 0, %s50
      %s65 = sphi 0, %s51
      %s69 = sphi 0, %s69
      %s71 = sphi 0, %s69
      %s72 = sphi 0, %s71
      %s86 = sphi 0, %s72
      %s90 = sphi 0, %s90
      %s92 = sphi 0, %s90
      %s93 = sphi 0, %s92
      %s107 = sphi 0, %s93
      %s111 = sphi 0, %s111
      %s113 = sphi 0, %s111
      %s114 = sphi 0, %s113
      %s128 = sphi 0, %s114
      %s134 = sphi 0, %s136
      %s137 = sphi 0, %s134
      %s138 = sphi 0, %s137
      %s154 = sphi 0, %s138
    $region4: #{tpu_custom_call.1} parent=1 // loop_header_branch
      %17 = sbr.rel (%p15) target = $region8
    $region5: #{tpu_custom_call.1} parent=1 // loop_body
      %s19 = ssub.s32 %s14, 1
      %s20 = ssub.s32 %s14, 2
      %s21 = sadd.s32 %s14, 1
      %s22 = ssub.s32 %s14, %s21
      %p23 = scmp.eq.s32.totalorder %s22, 0
      %s25 = sadd.s32 %s24, 1
      %s26 = scalar_select %p23, %s24, %s25
      %p29 = pneg %p23
      %p30 = scmp.eq.s32.totalorder %s14, 1
      %p31 = por %p29, %p30
      %p32 = scmp.ne.s32.totalorder %s24, %s27
      %p33 = scmp.eq.s32.totalorder %s14, 0
      %p34 = por %p32, %p33
      %p35 = scmp.ne.s32.totalorder %s24, %s27
      %p36 = scmp.eq.s32.totalorder %s19, 1
      %p37 = por %p35, %p36
      %p38 = scmp.ne.s32.totalorder %s27, %s28
      %p39 = scmp.eq.s32.totalorder %s19, 0
      %p40 = por %p38, %p39
      %p41 = scmp.ne.s32.totalorder %s27, %s28
      %p42 = scmp.eq.s32.totalorder %s20, 1
      %p43 = por %p41, %p42
      %p45 = scmp.ne.s32.totalorder %s28, %s44
      %p46 = scmp.eq.s32.totalorder %s20, 0
      %p47 = por %p45, %p46
      %s49 = sadd.s32 %s48, 1
      %p52 = scmp.eq.s32.totalorder %s14, 1
      %p53 = scmp.ne.s32.totalorder %s48, %s50
      %p54 = scmp.eq.s32.totalorder %s14, 0
      %p55 = por %p53, %p54
      %p56 = scmp.ne.s32.totalorder %s48, %s50
      %p57 = scmp.eq.s32.totalorder %s19, 1
      %p58 = por %p56, %p57
      %p59 = scmp.ne.s32.totalorder %s50, %s51
      %p60 = scmp.eq.s32.totalorder %s19, 0
      %p61 = por %p59, %p60
      %p62 = scmp.ne.s32.totalorder %s50, %s51
      %p63 = scmp.eq.s32.totalorder %s20, 1
      %p64 = por %p62, %p63
      %p66 = scmp.ne.s32.totalorder %s51, %s65
      %p67 = scmp.eq.s32.totalorder %s20, 0
      %p68 = por %p66, %p67
      %s70 = sadd.s32 %s69, 1
      %p73 = scmp.eq.s32.totalorder %s14, 1
      %p74 = scmp.ne.s32.totalorder %s69, %s71
      %p75 = scmp.eq.s32.totalorder %s14, 0
      %p76 = por %p74, %p75
      %p77 = scmp.ne.s32.totalorder %s69, %s71
      %p78 = scmp.eq.s32.totalorder %s19, 1
      %p79 = por %p77, %p78
      %p80 = scmp.ne.s32.totalorder %s71, %s72
      %p81 = scmp.eq.s32.totalorder %s19, 0
      %p82 = por %p80, %p81
      %p83 = scmp.ne.s32.totalorder %s71, %s72
      %p84 = scmp.eq.s32.totalorder %s20, 1
      %p85 = por %p83, %p84
      %p87 = scmp.ne.s32.totalorder %s72, %s86
      %p88 = scmp.eq.s32.totalorder %s20, 0
      %p89 = por %p87, %p88
      %s91 = sadd.s32 %s90, 1
      %p94 = scmp.eq.s32.totalorder %s14, 1
      %p95 = scmp.ne.s32.totalorder %s90, %s92
      %p96 = scmp.eq.s32.totalorder %s14, 0
      %p97 = por %p95, %p96
      %p98 = scmp.ne.s32.totalorder %s90, %s92
      %p99 = scmp.eq.s32.totalorder %s19, 1
      %p100 = por %p98, %p99
      %p101 = scmp.ne.s32.totalorder %s92, %s93
      %p102 = scmp.eq.s32.totalorder %s19, 0
      %p103 = por %p101, %p102
      %p104 = scmp.ne.s32.totalorder %s92, %s93
      %p105 = scmp.eq.s32.totalorder %s20, 1
      %p106 = por %p104, %p105
      %p108 = scmp.ne.s32.totalorder %s93, %s107
      %p109 = scmp.eq.s32.totalorder %s20, 0
      %p110 = por %p108, %p109
      %s112 = sadd.s32 %s111, 1
      %p115 = scmp.eq.s32.totalorder %s14, 1
      %p116 = scmp.ne.s32.totalorder %s111, %s113
      %p117 = scmp.eq.s32.totalorder %s14, 0
      %p118 = por %p116, %p117
      %p119 = scmp.ne.s32.totalorder %s111, %s113
      %p120 = scmp.eq.s32.totalorder %s19, 1
      %p121 = por %p119, %p120
      %p122 = scmp.ne.s32.totalorder %s113, %s114
      %p123 = scmp.eq.s32.totalorder %s19, 0
      %p124 = por %p122, %p123
      %p125 = scmp.ne.s32.totalorder %s113, %s114
      %p126 = scmp.eq.s32.totalorder %s20, 1
      %p127 = por %p125, %p126
      %p129 = scmp.ne.s32.totalorder %s114, %s128
      %p130 = scmp.eq.s32.totalorder %s20, 0
      %p131 = por %p129, %p130
      %s132 = ssub.s32 %s14, %s21
      %p133 = scmp.eq.s32.totalorder %s132, 0
      %s135 = sadd.s32 %s134, 1
      %s136 = scalar_select %p133, %s134, %s135
      %p139 = pneg %p133
      %p140 = scmp.eq.s32.totalorder %s14, 1
      %p141 = por %p139, %p140
      %p142 = scmp.ne.s32.totalorder %s134, %s137
      %p143 = scmp.eq.s32.totalorder %s14, 0
      %p144 = por %p142, %p143
      %p145 = scmp.ne.s32.totalorder %s134, %s137
      %p146 = scmp.eq.s32.totalorder %s19, 1
      %p147 = por %p145, %p146
      %p148 = scmp.ne.s32.totalorder %s137, %s138
      %p149 = scmp.eq.s32.totalorder %s19, 0
      %p150 = por %p148, %p149
      %p151 = scmp.ne.s32.totalorder %s137, %s138
      %p152 = scmp.eq.s32.totalorder %s20, 1
      %p153 = por %p151, %p152
      %p155 = scmp.ne.s32.totalorder %s138, %s154
      %p156 = scmp.eq.s32.totalorder %s20, 0
      %p157 = por %p155, %p156
      %p158 = scmp.le.s32.totalorder 1, %s14
      %p159 = scmp.lt.s32.totalorder %s14, 3
      %p160 = pnand %p158, %p159
      %p161 = pneg %p160
      // Predicated region
      $region9: #{tpu_custom_call.1} parent=5 // pred_check
        _
      $region10: #{tpu_custom_call.1} parent=5 // pred_check_branch
        %163 = sbr.rel (%p160) target = $region12
      $region11: #{tpu_custom_call.1} parent=5 // pred_region
        %s164 = ssub.s32 %s14, 1
        // Predicated region
        $region13: #{tpu_custom_call.1} parent=11 // pred_check
          %p165 = pneg %p61
        $region14: #{tpu_custom_call.1} parent=11 // pred_check_branch
          %167 = sbr.rel (%p165) target = $region16
        $region15: #{tpu_custom_call.1} parent=11 // pred_region
          _
        $region16: #{tpu_custom_call.1} parent=11 // pred_fallthru
          _
        // Predicated region
        $region17: #{tpu_custom_call.1} parent=11 // pred_check
          %p168 = pneg %p82
        $region18: #{tpu_custom_call.1} parent=11 // pred_check_branch
          %170 = sbr.rel (%p168) target = $region20
        $region19: #{tpu_custom_call.1} parent=11 // pred_region
          _
        $region20: #{tpu_custom_call.1} parent=11 // pred_fallthru
          _
        // Predicated region
        $region21: #{tpu_custom_call.1} parent=11 // pred_check
          %p171 = pneg %p103
        $region22: #{tpu_custom_call.1} parent=11 // pred_check_branch
          %173 = sbr.rel (%p171) target = $region24
        $region23: #{tpu_custom_call.1} parent=11 // pred_region
          _
        $region24: #{tpu_custom_call.1} parent=11 // pred_fallthru
          _
        // Predicated region
        $region25: #{tpu_custom_call.1} parent=11 // pred_check
          %p174 = pneg %p124
        $region26: #{tpu_custom_call.1} parent=11 // pred_check_branch
          %176 = sbr.rel (%p174) target = $region28
        $region27: #{tpu_custom_call.1} parent=11 // pred_region
          _
        $region28: #{tpu_custom_call.1} parent=11 // pred_fallthru
          _
      $region12: #{tpu_custom_call.1} parent=5 // pred_fallthru
        _
      %p177 = scmp.lt.s32.totalorder %s14, 2
      // Predicated region
      $region29: #{tpu_custom_call.1} parent=5 // pred_check
        %p178 = pneg %p177
      $region30: #{tpu_custom_call.1} parent=5 // pred_check_branch
        %180 = sbr.rel (%p178) target = $region32
      $region31: #{tpu_custom_call.1} parent=5 // pred_region
        // Predicated region
        $region33: #{tpu_custom_call.1} parent=31 // pred_check
          %p181 = pneg %p34
        $region34: #{tpu_custom_call.1} parent=31 // pred_check_branch
          %183 = sbr.rel (%p181) target = $region36
        $region35: #{tpu_custom_call.1} parent=31 // pred_region
          %s184 = smul.u32 16, %s14
          %s185 = ssub.s32 25, %s184
          %p186 = scmp.lt.s32.totalorder %s185, 16
          %s187 = scalar_select %p186, %s185, 16
          %s188 = smul.u32 128, %s187
          %p189 = scmp.lt.s32.totalorder %s184, 24
          %s190 = scalar_select %p189, %s184, 24
          %s191 = smul.addr %s190, 8
          %s192 = scalar_lea.vmem %s0, %s191
          %s193 = smul.u32 16, %s14
          %s194 = ssub.s32 25, %s193
          %p195 = scmp.lt.s32.totalorder %s194, 16
          %s196 = scalar_select %p195, %s194, 16
          %s197 = smul.u32 128, %s196
        $region36: #{tpu_custom_call.1} parent=31 // pred_fallthru
          _
      $region32: #{tpu_custom_call.1} parent=5 // pred_fallthru
        _
      %p198 = scmp.le.s32.totalorder 1, %s14
      %p199 = scmp.lt.s32.totalorder %s14, 3
      %p200 = pnand %p198, %p199
      %p201 = pneg %p200
      // Predicated region
      $region37: #{tpu_custom_call.1} parent=5 // pred_check
        _
      $region38: #{tpu_custom_call.1} parent=5 // pred_check_branch
        %203 = sbr.rel (%p200) target = $region40
      $region39: #{tpu_custom_call.1} parent=5 // pred_region
        %s204 = ssub.s32 %s14, 1
        %s205 = smul.u32 16, %s19
        %s206 = ssub.s32 25, %s205
        %p207 = scmp.lt.s32.totalorder %s206, 16
        %s208 = scalar_select %p207, %s206, 16
        %s209 = smul.u32 128, %s208
        %p210 = scmp.lt.s32.totalorder %s205, 24
        %s211 = scalar_select %p210, %s205, 24
        %s212 = smul.addr %s211, 8
        %s213 = scalar_lea.vmem %s0, %s212
        %p214 = pneg %p40
        %p215 = pneg %p37
        %p216 = pneg %p61
        %p217 = pneg %p58
        %p218 = pneg %p82
        %p219 = pneg %p79
        %p220 = pneg %p103
        %p221 = pneg %p100
        %p222 = pneg %p124
        %p223 = pneg %p121
        %p224 = pneg %p150
        %p225 = pneg %p147
        %s226 = sand.u32 %s137, 1
        %s227 = scalar_lea.sflag [#allocation3], %s226
        %s228 = sand.u32 %s137, 1
        %s229 = smul.addr %s228, 256
        %s230 = scalar_lea.vmem [#allocation2], %s229
        %s231 = smul.u32 16, %s19
        %s232 = ssub.s32 25, %s231
        %p233 = scmp.lt.s32.totalorder %s232, 16
        %s234 = scalar_select %p233, %s232, 16
        %s235 = smul.u32 128, %s234
        %p236 = scmp.lt.s32.totalorder %s231, 24
        %s237 = scalar_select %p236, %s231, 24
        %s238 = smul.addr %s237, 8
        %s239 = scalar_lea.vmem %s0, %s238
        %s240 = smul.u32 16, %s19
        %s241 = ssub.s32 25, %s240
        %p242 = scmp.lt.s32.totalorder %s241, 16
        %s243 = scalar_select %p242, %s241, 16
        %s244 = smul.u32 128, %s243
        %s245 = smul.u32 16, %s19
        %s246 = ssub.s32 25, %s245
        %p247 = scmp.lt.s32.totalorder %s246, 16
        %s248 = scalar_select %p247, %s246, 16
        %s249 = smul.u32 128, %s248
        %s250 = smul.u32 %s249, 2
        %v252 = vld [vmem:[%s239] sm:$0xff]
        %v253 = vld [vmem:[%s239 + $0x8] sm:$0xff]
        %v254 = vld [vmem:[%s239 + $0x10] sm:$0xff]
        %v255 = vld [vmem:[%s239 + $0x18] sm:$0xff]
        %v256 = vld [vmem:[%s239 + $0x20] sm:$0xff]
        %v257 = vld [vmem:[%s239 + $0x28] sm:$0xff]
        %v258 = vld [vmem:[%s239 + $0x30] sm:$0xff]
        %v259 = vld [vmem:[%s239 + $0x38] sm:$0xff]
        %v260 = vld [vmem:[%s239 + $0x40] sm:$0xff]
        %v261 = vld [vmem:[%s239 + $0x48] sm:$0xff]
        %v262 = vld [vmem:[%s239 + $0x50] sm:$0xff]
        %v263 = vld [vmem:[%s239 + $0x58] sm:$0xff]
        %v264 = vld [vmem:[%s239 + $0x60] sm:$0xff]
        %v265 = vld [vmem:[%s239 + $0x68] sm:$0xff]
        %v266 = vld [vmem:[%s239 + $0x70] sm:$0xff]
        %v267 = vld [vmem:[%s239 + $0x78] sm:$0xff]
        %v268 = vpack.c.bf16 %v253, %v252
        %v269 = vpack.c.bf16 %v255, %v254
        %v270 = vpack.c.bf16 %v257, %v256
        %v271 = vpack.c.bf16 %v259, %v258
        %v272 = vpack.c.bf16 %v261, %v260
        %v273 = vpack.c.bf16 %v263, %v262
        %v274 = vpack.c.bf16 %v265, %v264
        %v275 = vpack.c.bf16 %v267, %v266
        %v276 = vld [vmem:[%s1] sm:$0xf]
        %v277 = vld [vmem:[%s1 + $0x4] sm:$0xf]
        %v278 = vld [vmem:[%s1 + $0x8] sm:$0xf]
        %v279 = vld [vmem:[%s1 + $0xc] sm:$0xf]
        %v280 = vld [vmem:[%s2] sm:$0x1]
        %v282 = vlaneseq
        %v283 = vshrl.u32 %v282, 7
        %v284 = vsub.s32 0, %v283
        %v285 = vrot.slane %v280, %v284
        %v291 = vunpack.c.l.b16 %v276
        %v292 = vunpack.c.l.b16 %v277
        %v293 = vunpack.c.l.b16 %v278
        %v294 = vunpack.c.l.b16 %v279
        %v295 = vpack.c.b16 %v292, %v291
        %v296 = vpack.c.b16 %v294, %v293
        %vm299 = vcmask 261120
        %v301 = vsel %vm299, %v268, 0
        %v304 = vsel %vm299, %v269, 0
        %v307 = vsel %vm299, %v270, 0
        %v310 = vsel %vm299, %v271, 0
        %v313 = vsel %vm299, %v272, 0
        %v316 = vsel %vm299, %v273, 0
        %v319 = vsel %vm299, %v274, 0
        %v322 = vsel %vm299, %v275, 0
        %324 = vmatprep.subr.bf16.mxu0 0
        %325 = vmatpush1.bf16.msra.mxu0 0
        %326 = vmatprep.subr.bf16.mxu0 0
        %327 = vmatpush1.bf16.msra.mxu0 0
        %328 = vmatprep.subr.bf16.mxu0 0
        %329 = vmatpush1.bf16.msra.mxu0 0
        %330 = vmatprep.subr.bf16.mxu0 0
        %331 = vmatpush1.bf16.msra.mxu0 0
        %332 = vmatprep.subr.bf16.mxu0 0
        %333 = vmatpush1.bf16.msra.mxu0 0
        %334 = vmatprep.subr.bf16.mxu0 0
        %335 = vmatpush1.bf16.msra.mxu0 0
        %336 = vmatprep.subr.bf16.mxu0 0
        %337 = vmatpush1.bf16.msra.mxu0 %v296
        %338 = vmatprep.subr.bf16.mxu0 0
        %339 = vmatpush1.bf16.msra.mxu0 %v295
        %340 = vmatprep.subr.bf16.mxu0 0
        %341 = vmatpush2.bf16.msra.mxu0 0
        %342 = vmatprep.subr.bf16.mxu0 0
        %343 = vmatpush2.bf16.msra.mxu0 0
        %344 = vmatprep.subr.bf16.mxu0 0
        %345 = vmatpush2.bf16.msra.mxu0 0
        %346 = vmatprep.subr.bf16.mxu0 0
        %347 = vmatpush2.bf16.msra.mxu0 0
        %348 = vmatprep.subr.bf16.mxu0 0
        %349 = vmatpush2.bf16.msra.mxu0 0
        %350 = vmatprep.subr.bf16.mxu0 0
        %351 = vmatpush2.bf16.msra.mxu0 0
        %352 = vmatprep.subr.bf16.mxu0 0
        %353 = vmatpush2.bf16.msra.mxu0 0
        %354 = vmatprep.subr.bf16.mxu0 0
        %355 = vmatpush2.bf16.msra.mxu0 0
        %356 = vmatprep.mubr.bf16.mxu0 0
        %357 = vmatmul.mubr.bf16.gmra.mxu0 %v301
        %v358 = vpop.f32.mrf.mxu0
        %v359 = vadd.f32 %v285, %v358
        %v360 = vpop.f32.mrf.mxu0
        %v361 = vpop.f32.mrf.mxu0
        %v362 = vadd.f32 %v285, %v361
        %v363 = vpop.f32.mrf.mxu0
        %364 = vmatprep.mubr.bf16.mxu0 0
        %365 = vmatmul.mubr.bf16.gmra.mxu0 %v304
        %v366 = vpop.f32.mrf.mxu0
        %v367 = vadd.f32 %v285, %v366
        %v368 = vpop.f32.mrf.mxu0
        %v369 = vpop.f32.mrf.mxu0
        %v370 = vadd.f32 %v285, %v369
        %v371 = vpop.f32.mrf.mxu0
        %372 = vmatprep.mubr.bf16.mxu0 0
        %373 = vmatmul.mubr.bf16.gmra.mxu0 %v307
        %v374 = vpop.f32.mrf.mxu0
        %v375 = vadd.f32 %v285, %v374
        %v376 = vpop.f32.mrf.mxu0
        %v377 = vpop.f32.mrf.mxu0
        %v378 = vadd.f32 %v285, %v377
        %v379 = vpop.f32.mrf.mxu0
        %380 = vmatprep.mubr.bf16.mxu0 0
        %381 = vmatmul.mubr.bf16.gmra.mxu0 %v310
        %v382 = vpop.f32.mrf.mxu0
        %v383 = vadd.f32 %v285, %v382
        %v384 = vpop.f32.mrf.mxu0
        %v385 = vpop.f32.mrf.mxu0
        %v386 = vadd.f32 %v285, %v385
        %v387 = vpop.f32.mrf.mxu0
        %388 = vmatprep.mubr.bf16.mxu0 0
        %389 = vmatmul.mubr.bf16.gmra.mxu0 %v313
        %v390 = vpop.f32.mrf.mxu0
        %v391 = vadd.f32 %v285, %v390
        %v392 = vpop.f32.mrf.mxu0
        %v393 = vpop.f32.mrf.mxu0
        %v394 = vadd.f32 %v285, %v393
        %v395 = vpop.f32.mrf.mxu0
        %396 = vmatprep.mubr.bf16.mxu0 0
        %397 = vmatmul.mubr.bf16.gmra.mxu0 %v316
        %v398 = vpop.f32.mrf.mxu0
        %v399 = vadd.f32 %v285, %v398
        %v400 = vpop.f32.mrf.mxu0
        %v401 = vpop.f32.mrf.mxu0
        %v402 = vadd.f32 %v285, %v401
        %v403 = vpop.f32.mrf.mxu0
        %404 = vmatprep.mubr.bf16.mxu0 0
        %405 = vmatmul.mubr.bf16.gmra.mxu0 %v319
        %v406 = vpop.f32.mrf.mxu0
        %v407 = vadd.f32 %v285, %v406
        %v408 = vpop.f32.mrf.mxu0
        %v409 = vpop.f32.mrf.mxu0
        %v410 = vadd.f32 %v285, %v409
        %v411 = vpop.f32.mrf.mxu0
        %412 = vmatprep.mubr.bf16.mxu0 0
        %413 = vmatmul.mubr.bf16.gmra.mxu0 %v322
        %v414 = vpop.f32.mrf.mxu0
        %v415 = vadd.f32 %v285, %v414
        %v416 = vpop.f32.mrf.mxu0
        %v417 = vpop.f32.mrf.mxu0
        %v418 = vadd.f32 %v285, %v417
        %v419 = vpop.f32.mrf.mxu0
        %420 = vdwg.mxu0
        %v421 = vmax.f32 %v359, 0.0
        %v422 = vmax.f32 %v362, 0.0
        %v423 = vmax.f32 %v367, 0.0
        %v424 = vmax.f32 %v370, 0.0
        %v425 = vmax.f32 %v375, 0.0
        %v426 = vmax.f32 %v378, 0.0
        %v427 = vmax.f32 %v383, 0.0
        %v428 = vmax.f32 %v386, 0.0
        %v429 = vmax.f32 %v391, 0.0
        %v430 = vmax.f32 %v394, 0.0
        %v431 = vmax.f32 %v399, 0.0
        %v432 = vmax.f32 %v402, 0.0
        %v433 = vmax.f32 %v407, 0.0
        %v434 = vmax.f32 %v410, 0.0
        %v435 = vmax.f32 %v415, 0.0
        %v436 = vmax.f32 %v418, 0.0
        %v437 = vpack.c.bf16 %v422, %v421
        %v438 = vpack.c.bf16 %v424, %v423
        %v439 = vpack.c.bf16 %v426, %v425
        %v440 = vpack.c.bf16 %v428, %v427
        %v441 = vpack.c.bf16 %v430, %v429
        %v442 = vpack.c.bf16 %v432, %v431
        %v443 = vpack.c.bf16 %v434, %v433
        %v444 = vpack.c.bf16 %v436, %v435
        %v445 = vld [vmem:[%s3] sm:$0xff]
        %v446 = vld [vmem:[%s3 + $0x8] sm:$0xff]
        %v447 = vld [vmem:[%s3 + $0x10] sm:$0xff]
        %v448 = vld [vmem:[%s3 + $0x18] sm:$0xff]
        %v449 = vld [vmem:[%s3 + $0x20] sm:$0xff]
        %v450 = vld [vmem:[%s3 + $0x28] sm:$0xff]
        %v451 = vld [vmem:[%s3 + $0x30] sm:$0xff]
        %v452 = vld [vmem:[%s3 + $0x38] sm:$0xff]
        %v453 = vld [vmem:[%s3 + $0x40] sm:$0xff]
        %v454 = vld [vmem:[%s3 + $0x48] sm:$0xff]
        %v455 = vld [vmem:[%s3 + $0x50] sm:$0xff]
        %v456 = vld [vmem:[%s3 + $0x58] sm:$0xff]
        %v457 = vld [vmem:[%s3 + $0x60] sm:$0xff]
        %v458 = vld [vmem:[%s3 + $0x68] sm:$0xff]
        %v459 = vld [vmem:[%s3 + $0x70] sm:$0xff]
        %v460 = vld [vmem:[%s3 + $0x78] sm:$0xff]
        %v461 = vld [vmem:[%s4] sm:$0x3]
        %v463 = vlaneseq
        %v464 = vshrl.u32 %v463, 7
        %v465 = vsub.s32 0, %v464
        %v466 = vrot.slane %v461, %v465
        %v467 = vlaneseq
        %v468 = vshrl.u32 %v467, 7
        %v469 = vsub.s32 1, %v468
        %v470 = vrot.slane %v461, %v469
        %v489 = vunpack.c.l.b16 %v445
        %v490 = vunpack.c.h.b16 %v445
        %v491 = vunpack.c.l.b16 %v446
        %v492 = vunpack.c.h.b16 %v446
        %v493 = vunpack.c.l.b16 %v447
        %v494 = vunpack.c.h.b16 %v447
        %v495 = vunpack.c.l.b16 %v448
        %v496 = vunpack.c.h.b16 %v448
        %v497 = vunpack.c.l.b16 %v449
        %v498 = vunpack.c.h.b16 %v449
        %v499 = vunpack.c.l.b16 %v450
        %v500 = vunpack.c.h.b16 %v450
        %v501 = vunpack.c.l.b16 %v451
        %v502 = vunpack.c.h.b16 %v451
        %v503 = vunpack.c.l.b16 %v452
        %v504 = vunpack.c.h.b16 %v452
        %v505 = vunpack.c.l.b16 %v453
        %v506 = vunpack.c.h.b16 %v453
        %v507 = vunpack.c.l.b16 %v454
        %v508 = vunpack.c.h.b16 %v454
        %v509 = vunpack.c.l.b16 %v455
        %v510 = vunpack.c.h.b16 %v455
        %v511 = vunpack.c.l.b16 %v456
        %v512 = vunpack.c.h.b16 %v456
        %v513 = vunpack.c.l.b16 %v457
        %v514 = vunpack.c.h.b16 %v457
        %v515 = vunpack.c.l.b16 %v458
        %v516 = vunpack.c.h.b16 %v458
        %v517 = vunpack.c.l.b16 %v459
        %v518 = vunpack.c.h.b16 %v459
        %v519 = vunpack.c.l.b16 %v460
        %v520 = vunpack.c.h.b16 %v460
        %v521 = vpack.c.b16 %v491, %v489
        %v522 = vpack.c.b16 %v492, %v490
        %v523 = vpack.c.b16 %v495, %v493
        %v524 = vpack.c.b16 %v496, %v494
        %v525 = vpack.c.b16 %v499, %v497
        %v526 = vpack.c.b16 %v500, %v498
        %v527 = vpack.c.b16 %v503, %v501
        %v528 = vpack.c.b16 %v504, %v502
        %v529 = vpack.c.b16 %v507, %v505
        %v530 = vpack.c.b16 %v508, %v506
        %v531 = vpack.c.b16 %v511, %v509
        %v532 = vpack.c.b16 %v512, %v510
        %v533 = vpack.c.b16 %v515, %v513
        %v534 = vpack.c.b16 %v516, %v514
        %v535 = vpack.c.b16 %v519, %v517
        %v536 = vpack.c.b16 %v520, %v518
        %553 = vmatprep.subr.bf16.mxu0 %v536
        %554 = vmatpush1.bf16.msra.mxu0 %v535
        %555 = vmatprep.subr.bf16.mxu0 %v534
        %556 = vmatpush1.bf16.msra.mxu0 %v533
        %557 = vmatprep.subr.bf16.mxu0 %v532
        %558 = vmatpush1.bf16.msra.mxu0 %v531
        %559 = vmatprep.subr.bf16.mxu0 %v530
        %560 = vmatpush1.bf16.msra.mxu0 %v529
        %561 = vmatprep.subr.bf16.mxu0 %v528
        %562 = vmatpush1.bf16.msra.mxu0 %v527
        %563 = vmatprep.subr.bf16.mxu0 %v526
        %564 = vmatpush1.bf16.msra.mxu0 %v525
        %565 = vmatprep.subr.bf16.mxu0 %v524
        %566 = vmatpush1.bf16.msra.mxu0 %v523
        %567 = vmatprep.subr.bf16.mxu0 %v522
        %568 = vmatpush1.bf16.msra.mxu0 %v521
        %569 = vmatprep.subr.bf16.mxu0 0
        %570 = vmatpush2.bf16.msra.mxu0 0
        %571 = vmatprep.subr.bf16.mxu0 0
        %572 = vmatpush2.bf16.msra.mxu0 0
        %573 = vmatprep.subr.bf16.mxu0 0
        %574 = vmatpush2.bf16.msra.mxu0 0
        %575 = vmatprep.subr.bf16.mxu0 0
        %576 = vmatpush2.bf16.msra.mxu0 0
        %577 = vmatprep.subr.bf16.mxu0 0
        %578 = vmatpush2.bf16.msra.mxu0 0
        %579 = vmatprep.subr.bf16.mxu0 0
        %580 = vmatpush2.bf16.msra.mxu0 0
        %581 = vmatprep.subr.bf16.mxu0 0
        %582 = vmatpush2.bf16.msra.mxu0 0
        %583 = vmatprep.subr.bf16.mxu0 0
        %584 = vmatpush2.bf16.msra.mxu0 0
        %585 = vmatprep.mubr.bf16.mxu0 0
        %586 = vmatmul.mubr.bf16.gmra.mxu0 %v437
        %v587 = vpop.f32.mrf.mxu0
        %v588 = vadd.f32 %v466, %v587
        %v589 = vpop.f32.mrf.mxu0
        %v590 = vadd.f32 %v470, %v589
        %v591 = vpop.f32.mrf.mxu0
        %v592 = vadd.f32 %v466, %v591
        %v593 = vpop.f32.mrf.mxu0
        %v594 = vadd.f32 %v470, %v593
        %595 = vmatprep.mubr.bf16.mxu0 0
        %596 = vmatmul.mubr.bf16.gmra.mxu0 %v438
        %v597 = vpop.f32.mrf.mxu0
        %v598 = vadd.f32 %v466, %v597
        %v599 = vpop.f32.mrf.mxu0
        %v600 = vadd.f32 %v470, %v599
        %v601 = vpop.f32.mrf.mxu0
        %v602 = vadd.f32 %v466, %v601
        %v603 = vpop.f32.mrf.mxu0
        %v604 = vadd.f32 %v470, %v603
        %605 = vmatprep.mubr.bf16.mxu0 0
        %606 = vmatmul.mubr.bf16.gmra.mxu0 %v439
        %v607 = vpop.f32.mrf.mxu0
        %v608 = vadd.f32 %v466, %v607
        %v609 = vpop.f32.mrf.mxu0
        %v610 = vadd.f32 %v470, %v609
        %v611 = vpop.f32.mrf.mxu0
        %v612 = vadd.f32 %v466, %v611
        %v613 = vpop.f32.mrf.mxu0
        %v614 = vadd.f32 %v470, %v613
        %615 = vmatprep.mubr.bf16.mxu0 0
        %616 = vmatmul.mubr.bf16.gmra.mxu0 %v440
        %v617 = vpop.f32.mrf.mxu0
        %v618 = vadd.f32 %v466, %v617
        %v619 = vpop.f32.mrf.mxu0
        %v620 = vadd.f32 %v470, %v619
        %v621 = vpop.f32.mrf.mxu0
        %v622 = vadd.f32 %v466, %v621
        %v623 = vpop.f32.mrf.mxu0
        %v624 = vadd.f32 %v470, %v623
        %625 = vmatprep.mubr.bf16.mxu0 0
        %626 = vmatmul.mubr.bf16.gmra.mxu0 %v441
        %v627 = vpop.f32.mrf.mxu0
        %v628 = vadd.f32 %v466, %v627
        %v629 = vpop.f32.mrf.mxu0
        %v630 = vadd.f32 %v470, %v629
        %v631 = vpop.f32.mrf.mxu0
        %v632 = vadd.f32 %v466, %v631
        %v633 = vpop.f32.mrf.mxu0
        %v634 = vadd.f32 %v470, %v633
        %635 = vmatprep.mubr.bf16.mxu0 0
        %636 = vmatmul.mubr.bf16.gmra.mxu0 %v442
        %v637 = vpop.f32.mrf.mxu0
        %v638 = vadd.f32 %v466, %v637
        %v639 = vpop.f32.mrf.mxu0
        %v640 = vadd.f32 %v470, %v639
        %v641 = vpop.f32.mrf.mxu0
        %v642 = vadd.f32 %v466, %v641
        %v643 = vpop.f32.mrf.mxu0
        %v644 = vadd.f32 %v470, %v643
        %645 = vmatprep.mubr.bf16.mxu0 0
        %646 = vmatmul.mubr.bf16.gmra.mxu0 %v443
        %v647 = vpop.f32.mrf.mxu0
        %v648 = vadd.f32 %v466, %v647
        %v649 = vpop.f32.mrf.mxu0
        %v650 = vadd.f32 %v470, %v649
        %v651 = vpop.f32.mrf.mxu0
        %v652 = vadd.f32 %v466, %v651
        %v653 = vpop.f32.mrf.mxu0
        %v654 = vadd.f32 %v470, %v653
        %655 = vmatprep.mubr.bf16.mxu0 0
        %656 = vmatmul.mubr.bf16.gmra.mxu0 %v444
        %v657 = vpop.f32.mrf.mxu0
        %v658 = vadd.f32 %v466, %v657
        %v659 = vpop.f32.mrf.mxu0
        %v660 = vadd.f32 %v470, %v659
        %v661 = vpop.f32.mrf.mxu0
        %v662 = vadd.f32 %v466, %v661
        %v663 = vpop.f32.mrf.mxu0
        %v664 = vadd.f32 %v470, %v663
        %665 = vdwg.mxu0
        %666 = vst [vmem:[%s230] sm:$0xff] %v588
        %667 = vst [vmem:[%s230 + $0x8] sm:$0xff] %v590
        %668 = vst [vmem:[%s230 + $0x10] sm:$0xff] %v592
        %669 = vst [vmem:[%s230 + $0x18] sm:$0xff] %v594
        %670 = vst [vmem:[%s230 + $0x20] sm:$0xff] %v598
        %671 = vst [vmem:[%s230 + $0x28] sm:$0xff] %v600
        %672 = vst [vmem:[%s230 + $0x30] sm:$0xff] %v602
        %673 = vst [vmem:[%s230 + $0x38] sm:$0xff] %v604
        %674 = vst [vmem:[%s230 + $0x40] sm:$0xff] %v608
        %675 = vst [vmem:[%s230 + $0x48] sm:$0xff] %v610
        %676 = vst [vmem:[%s230 + $0x50] sm:$0xff] %v612
        %677 = vst [vmem:[%s230 + $0x58] sm:$0xff] %v614
        %678 = vst [vmem:[%s230 + $0x60] sm:$0xff] %v618
        %679 = vst [vmem:[%s230 + $0x68] sm:$0xff] %v620
        %680 = vst [vmem:[%s230 + $0x70] sm:$0xff] %v622
        %681 = vst [vmem:[%s230 + $0x78] sm:$0xff] %v624
        %682 = vst [vmem:[%s230 + $0x80] sm:$0xff] %v628
        %683 = vst [vmem:[%s230 + $0x88] sm:$0xff] %v630
        %684 = vst [vmem:[%s230 + $0x90] sm:$0xff] %v632
        %685 = vst [vmem:[%s230 + $0x98] sm:$0xff] %v634
        %686 = vst [vmem:[%s230 + $0xa0] sm:$0xff] %v638
        %687 = vst [vmem:[%s230 + $0xa8] sm:$0xff] %v640
        %688 = vst [vmem:[%s230 + $0xb0] sm:$0xff] %v642
        %689 = vst [vmem:[%s230 + $0xb8] sm:$0xff] %v644
        %690 = vst [vmem:[%s230 + $0xc0] sm:$0xff] %v648
        %691 = vst [vmem:[%s230 + $0xc8] sm:$0xff] %v650
        %692 = vst [vmem:[%s230 + $0xd0] sm:$0xff] %v652
        %693 = vst [vmem:[%s230 + $0xd8] sm:$0xff] %v654
        %694 = vst [vmem:[%s230 + $0xe0] sm:$0xff] %v658
        %695 = vst [vmem:[%s230 + $0xe8] sm:$0xff] %v660
        %696 = vst [vmem:[%s230 + $0xf0] sm:$0xff] %v662
        %697 = vst [vmem:[%s230 + $0xf8] sm:$0xff] %v664
        %s698 = sand.u32 %s137, 1
        %s699 = scalar_lea.sflag [#allocation3], %s698
        %s700 = sand.u32 %s137, 1
        %s701 = smul.addr %s700, 256
        %s702 = scalar_lea.vmem [#allocation2], %s701
        // Predicated region
        $region41: #{tpu_custom_call.1} parent=39 // pred_check
          %p703 = pneg %p147
        $region42: #{tpu_custom_call.1} parent=39 // pred_check_branch
          %705 = sbr.rel (%p703) target = $region44
        $region43: #{tpu_custom_call.1} parent=39 // pred_region
          %s706 = smul.u32 16, %s19
          %s707 = ssub.s32 25, %s706
          %p708 = scmp.lt.s32.totalorder %s707, 16
          %s709 = scalar_select %p708, %s707, 16
          %s710 = smul.u32 128, %s709
          %s711 = smul.u32 %s710, 2
          %s713 = ssub.s32 4096, %s711
          %714 = vsyncadd %s699, %s713
          %p715 = scmp.ne.s32.totalorder 0, %s711
          %s716 = smul.addr %s706, 2
          %s717 = smul.addr %s716, 128
          %s718 = scalar_lea.hbm %s5, %s717
          %s719 = smul.u32 16, %s709
          %s720 = sshll.u32 %s702, 4
          %s721 = int_to_ptr.vmem [resolvable:$true] %s720
          %s722 = sshll.u32 %s719, 4
          %726 = dma.vmem_to_hbm [thread:$0]  (%p715), %s721, %s722, %s718, %s699, 256, 256, 16
        $region44: #{tpu_custom_call.1} parent=39 // pred_fallthru
          _
      $region40: #{tpu_custom_call.1} parent=5 // pred_fallthru
        _
      %p727 = scmp.le.s32.totalorder 2, %s14
      // Predicated region
      $region45: #{tpu_custom_call.1} parent=5 // pred_check
        %p728 = pneg %p727
      $region46: #{tpu_custom_call.1} parent=5 // pred_check_branch
        %730 = sbr.rel (%p728) target = $region48
      $region47: #{tpu_custom_call.1} parent=5 // pred_region
        %s731 = ssub.s32 %s14, 2
        // Predicated region
        $region49: #{tpu_custom_call.1} parent=47 // pred_check
          %p732 = pneg %p153
        $region50: #{tpu_custom_call.1} parent=47 // pred_check_branch
          %734 = sbr.rel (%p732) target = $region52
        $region51: #{tpu_custom_call.1} parent=47 // pred_region
          %s735 = sand.u32 %s138, 1
          %s736 = scalar_lea.sflag [#allocation3], %s735
          %s737 = sand.u32 %s138, 1
          %s738 = smul.addr %s737, 256
          %s739 = scalar_lea.vmem [#allocation2], %s738
          %740 = dma.done %s736, 4096
        $region52: #{tpu_custom_call.1} parent=47 // pred_fallthru
          _
      $region48: #{tpu_custom_call.1} parent=5 // pred_fallthru
        _
    $region6: #{tpu_custom_call.1} parent=1 // loop_footer
      %s18 = sadd.s32 1, %s14
    $region7: #{tpu_custom_call.1} parent=1 // loop_footer_branch
      %13 = sbr.rel target = $region3
    $region8: #{tpu_custom_call.1} parent=1 // loop_exit
      _
    %741 = vsyncpa [#allocation3], 1
    %s742 = scalar_lea.sflag [#allocation3], 1
    %743 = vsyncpa %s742, 1

</llo_original>
